<compile_context>
chip_gen: v7x
topology: tpu7x:2x2x1
jax: 0.10.0
libtpu: 0.0.40
codegen_flags: <defaults>
</compile_context>

<pallas_src>
import functools

import jax
import jax.numpy as jnp
from jax.experimental import pallas as pl
from jax.experimental.pallas import tpu as pltpu

# ---- scaled-down constants (real LLaVA values noted) -----------------------
IGNORE_INDEX = -100
IMAGE_TOKEN_INDEX = 120     # real: 32000
IMAGE_PAD_INDEX = 121       # real: 32001
NUM_IMAGE_PATCHES = 32      # real: 576


# --------------------------------------------------------------------------- helpers
def _round_up(x, m):
    return ((x + m - 1) // m) * m


def _tpu_generation():
    """(generation tag, per-core VMEM bytes) -- best effort, safe fallback."""
    try:
        kind = jax.devices()[0].device_kind.lower()
    except Exception:
        return "v6e", 128 * (1 << 20)
    if "v7" in kind:
        return "v7x", 64 * (1 << 20)
    if "v6" in kind:
        return "v6e", 128 * (1 << 20)
    if "v5" in kind or "v4" in kind:
        return "v5e", 128 * (1 << 20)
    return "v6e", 128 * (1 << 20)


def _tile_targets(gen):
    """(row tile, vocab tile) targets at real model sizes."""
    if gen == "v7x":
        return 512, 1024        # 64 MiB VMEM/TC; compute-bound anyway (ridge ~310 flop/B)
    if gen == "v5e":
        return 512, 2048        # v5e ridge ~240 flop/B: compute-bound at tile_r ~256-512
    return 1024, 2048           # v6e: memory-bound on weight streaming -> big row tile


def _vmem_need(tile_r, tile_v, h):
    """Rough VMEM footprint of the kernel for given tiles (bytes)."""
    return (2 * tile_v * h * 2          # double-buffered bf16 weight
            + 2 * h * tile_r * 2        # double-buffered bf16 hidden
            + 4 * tile_v * tile_r * 4   # f32 logits + elementwise temporaries
            + 32 * tile_r * 4)          # labels / loss / LSE scratch


def _vmem_limit(tile_r, tile_v, h, cap):
    need = _vmem_need(tile_r, tile_v, h)
    return int(max(32 << 20, min(int(need * 1.3) + (2 << 20), int(cap * 0.9))))


# --------------------------------------------------------------------------- kernel
def _ce_kernel(hid_ref, w_ref, lab_ref, loss_ref, m_acc, l_acc, sel_acc, *, v_total):
    """Grid = (row_tiles, vocab_tiles); the vocab axis is an online-LSE reduction.

    hid_ref : (1, H, TILE_R)     bf16  -- transposed hidden rows (tokens on the lane axis)
    w_ref   : (TILE_V, H)        bf16  -- LM-head weight tile (PyTorch (V, H) layout)
    lab_ref : (1, 1, TILE_R)     int32 -- shifted expanded labels for this row tile
    loss_ref: (1, 1, TILE_R)     f32   -- per-token CE loss (reduction='none'), lane-dense
    m_acc / l_acc / sel_acc : (1, TILE_R) f32 scratch -- running max / sum-exp / picked logit
    """
    v_idx = pl.program_id(1)

    @pl.when(v_idx == 0)
    def _():
        m_acc[...] = jnp.full_like(m_acc, -jnp.inf)
        l_acc[...] = jnp.zeros_like(l_acc)
        sel_acc[...] = jnp.zeros_like(sel_acc)

    # (TILE_V, H) @ (H, TILE_R) -> (TILE_V, TILE_R): vocab on sublanes, tokens on lanes (MXU).
    logits = jnp.dot(w_ref[...], hid_ref[0], preferred_element_type=jnp.float32)
    tv, _ = logits.shape

    labels = lab_ref[0]                                             # (1, TILE_R) int32
    local_iota = jax.lax.broadcasted_iota(jnp.int32, (tv, 1), 0)    # (TILE_V, 1)

    # Mask padded vocab rows (only emitted when the real vocab is not a tile multiple).
    if v_total % tv != 0:
        vocab_pos = local_iota + v_idx * tv
        logits = jnp.where(vocab_pos < v_total, logits, -jnp.inf)

    # One-hot pick of the label logit: compare a (TILE_V,1) iota against the shifted labels.
    local_labels = labels - v_idx * tv                              # (1, TILE_R)
    sel_acc[...] += jnp.sum(jnp.where(local_iota == local_labels, logits, 0.0),
                            axis=0, keepdims=True)

    # Online log-sum-exp over the vocab tiles.
    m_new = jnp.maximum(m_acc[...], jnp.max(logits, axis=0, keepdims=True))
    l_acc[...] = l_acc[...] * jnp.exp(m_acc[...] - m_new) + jnp.sum(
        jnp.exp(logits - m_new), axis=0, keepdims=True)
    m_acc[...] = m_new

    @pl.when(v_idx == pl.num_programs(1) - 1)
    def _():
        valid = labels != IGNORE_INDEX
        lse = m_acc[...] + jnp.log(l_acc[...])
        loss_ref[0] = jnp.where(valid, lse - sel_acc[...], 0.0).astype(loss_ref.dtype)


# --------------------------------------------------------------------------- label expansion
def build_expanded_labels(input_ids, t_exp):
    """JAX glue mirroring the torch label construction in score_text."""
    b, _ = input_ids.shape
    img_mask = input_ids == IMAGE_TOKEN_INDEX
    new_pos = jnp.cumsum(
        img_mask.astype(jnp.int32) * (NUM_IMAGE_PATCHES - 1) + 1, axis=-1) - 1
    text_mask = (~img_mask) & (input_ids != IMAGE_PAD_INDEX)
    vals = jnp.where(text_mask, input_ids, IGNORE_INDEX).astype(jnp.int32)
    labels = jnp.full((b, t_exp), IGNORE_INDEX, dtype=jnp.int32)
    labels = jax.vmap(lambda l, p, v: l.at[p].set(v))(labels, new_pos, vals)
    return labels


# --------------------------------------------------------------------------- wrapper
class PallasTextScorer:
    """Fused LM-head + CrossEntropy scorer (GenerativeWrapper.score_text hot path).

    The bf16, vocab-padded LM-head weight is prepared ONCE at construction and reused
    across calls (avoids a full-weight HBM re-cast per scoring call at real sizes).
    """

    def __init__(self, lm_head_w, *, tile_r=None, tile_v=None):
        v, h = lm_head_w.shape
        self.v_total = int(v)
        self.h = int(h)
        self.gen, self.vmem_cap = _tpu_generation()

        tr_tgt, tv_tgt = _tile_targets(self.gen)
        if tile_r is not None:
            assert tile_r % 128 == 0
            tr_tgt = tile_r
        self.tile_r_max = tr_tgt

        tv = tile_v if tile_v is not None else min(tv_tgt, _round_up(v, 128))
        assert tv % 128 == 0
        # shrink the vocab tile until the worst-case (tile_r_max) VMEM footprint fits
        while tv > 128 and _vmem_need(self.tile_r_max, tv, self.h) > 0.7 * self.vmem_cap:
            tv //= 2
        self.tile_v = max(128, tv)

        vp = _round_up(v, self.tile_v)
        self.n_vt = vp // self.tile_v
        # cached, padded bf16 weight (padded rows are zero; masked to -inf in the kernel)
        self.w_bf16 = jnp.pad(lm_head_w.astype(jnp.bfloat16), ((0, vp - v), (0, 0)))

    def score_text(self, hidden, input_ids):
        """hidden: (B, T_exp, H) final hidden states; input_ids: (B, T_in) raw tokens."""
        b, t_exp, h = hidden.shape
        assert h == self.h
        labels = build_expanded_labels(input_ids, t_exp)
        labels_s = labels[:, 1:]                                    # shift_labels (B, T-1)
        tm1 = t_exp - 1
        r = b * tm1

        # ---- row tiling (batch flattened onto the lane axis) --------------
        tile_r = min(self.tile_r_max, _round_up(r, 128))
        while tile_r > 128 and _vmem_need(tile_r, self.tile_v, h) > 0.7 * self.vmem_cap:
            tile_r -= 128
        if self.gen == "v7x":
            # keep both TensorCores busy: aim for an even number of row tiles
            while tile_r > 256 and (pl.cdiv(r, tile_r) % 2) == 1:
                tile_r -= 128
        n_rt = pl.cdiv(r, tile_r)
        rp = n_rt * tile_r

        # ---- pack inputs ---------------------------------------------------
        hid = hidden[:, :-1, :].astype(jnp.bfloat16).reshape(r, h)  # shift hidden states
        hid = jnp.pad(hid, ((0, rp - r), (0, 0)))
        # (n_rt, H, TILE_R): each row-tile hidden block is one contiguous DMA
        hid = hid.reshape(n_rt, tile_r, h).transpose(0, 2, 1)
        lab = jnp.pad(labels_s.reshape(r), (0, rp - r),
                      constant_values=IGNORE_INDEX).reshape(n_rt, 1, tile_r)

        tile_v = self.tile_v
        kernel = functools.partial(_ce_kernel, v_total=self.v_total)

        losses = pl.pallas_call(
            kernel,
            out_shape=jax.ShapeDtypeStruct((n_rt, 1, tile_r), jnp.float32),
            grid=(n_rt, self.n_vt),                                 # vocab (reduction) axis last
            in_specs=[
                pl.BlockSpec((1, h, tile_r), lambda i, j: (i, 0, 0)),   # hidden: resident over vocab
                pl.BlockSpec((tile_v, h), lambda i, j: (j, 0)),         # weight: streamed per vocab tile
                pl.BlockSpec((1, 1, tile_r), lambda i, j: (i, 0, 0)),   # labels
            ],
            out_specs=pl.BlockSpec((1, 1, tile_r), lambda i, j: (i, 0, 0)),
            scratch_shapes=[pltpu.VMEM((1, tile_r), jnp.float32)] * 3,
            compiler_params=pltpu.CompilerParams(
                dimension_semantics=("parallel", "arbitrary"),
                vmem_limit_bytes=_vmem_limit(tile_r, tile_v, h, self.vmem_cap)),
        )(hid, self.w_bf16, lab)

        tok_losses = losses.reshape(rp)[:r].reshape(b, tm1)
        # NOTE: the torch module flattens shift_labels with .view(-1), so its denominator is
        # the TOTAL valid-label count across the batch; replicate that literally.
        total_valid = jnp.sum(labels_s != IGNORE_INDEX)
        scores = tok_losses.sum(-1) / total_valid
        return scores, tok_losses, labels_s


# --------------------------------------------------------------------------- reference
def _reference(hidden, lm_head_w, input_ids):
    """Pure-JAX reference mirroring the torch code path (bf16 operands, f32 math)."""
    b, t_exp, _ = hidden.shape
    labels = build_expanded_labels(input_ids, t_exp)
    h = hidden[:, :-1, :].astype(jnp.bfloat16).astype(jnp.float32)
    w = lm_head_w.astype(jnp.bfloat16).astype(jnp.float32)
    logits = jnp.einsum('bth,vh->btv', h, w,
                        preferred_element_type=jnp.float32,
                        precision=jax.lax.Precision.HIGHEST)
    shift_labels = labels[:, 1:]
    logp = jax.nn.log_softmax(logits, axis=-1)
    valid = shift_labels != IGNORE_INDEX
    safe = jnp.where(valid, shift_labels, 0)
    tok_loss = jnp.where(
        valid, -jnp.take_along_axis(logp, safe[..., None], axis=-1)[..., 0], 0.0)
    scores = tok_loss.sum(-1) / valid.sum()
    return scores, tok_loss


# --------------------------------------------------------------------------- main
if __name__ == "__main__":
    key = jax.random.PRNGKey(0)
    k_hid, k_w, k_ids = jax.random.split(key, 3)

    B = 3            # batch
    T_IN = 16        # raw (unexpanded) token sequence length
    H = 128          # hidden size (real: 4096)
    V = 500          # vocab size, deliberately NOT a 128-multiple (real: 32064)
    T_EXP = T_IN + NUM_IMAGE_PATCHES - 1   # expanded length (one image token / sample)

    # synthetic processor output: text tokens + one image token at position 1
    input_ids = jax.random.randint(k_ids, (B, T_IN), 2, 100, dtype=jnp.int32)
    input_ids = input_ids.at[:, 1].set(IMAGE_TOKEN_INDEX)

    # synthetic model final hidden states (expanded sequence) + LM head (V, H)
    hidden = jax.random.normal(k_hid, (B, T_EXP, H), dtype=jnp.float32)
    lm_head_w = 0.05 * jax.random.normal(k_w, (V, H), dtype=jnp.float32)

    ref_scores, ref_losses = _reference(hidden, lm_head_w, input_ids)

    # 1) auto-tiled, generation-aware configuration (single vocab/row tile at this size)
    scorer = PallasTextScorer(lm_head_w)
    scores, losses, _ = scorer.score_text(hidden, input_ids)
    scores, losses = jax.block_until_ready((scores, losses))
    assert jnp.allclose(losses, ref_losses, rtol=1e-2, atol=1e-2), "per-token loss mismatch"
    assert jnp.allclose(scores, ref_scores, rtol=1e-2, atol=1e-2), "per-sample score mismatch"

    # 2) small tiles: forces multiple vocab tiles (online LSE + padded-vocab masking)
    #    and multiple row tiles (row padding) to exercise the full grid path.
    scorer_small = PallasTextScorer(lm_head_w, tile_r=128, tile_v=128)
    scores2, losses2, _ = scorer_small.score_text(hidden, input_ids)
    scores2, losses2 = jax.block_until_ready((scores2, losses2))
    assert jnp.allclose(losses2, ref_losses, rtol=1e-2, atol=1e-2), "tiled per-token loss mismatch"
    assert jnp.allclose(scores2, ref_scores, rtol=1e-2, atol=1e-2), "tiled per-sample score mismatch"

    print("KERNEL_OK")
</pallas_src>

<mosaic_0001>
module attributes {stable_mosaic.version = 11 : i64} {
  func.func @_ce_kernel(%arg0: i32, %arg1: i32, %arg2: memref<1x128x256xbf16, #tpu.memory_space<vmem>>, %arg3: memref<512x128xbf16, #tpu.memory_space<vmem>>, %arg4: memref<1x1x256xi32, #tpu.memory_space<vmem>>, %arg5: memref<1x1x256xf32, #tpu.memory_space<vmem>>, %arg6: memref<1x256xf32, #tpu.memory_space<vmem>>, %arg7: memref<1x256xf32, #tpu.memory_space<vmem>>, %arg8: memref<1x256xf32, #tpu.memory_space<vmem>>) attributes {dimension_semantics = [#tpu.dimension_semantics<parallel>, #tpu.dimension_semantics<arbitrary>], iteration_bounds = array<i64: 1, 1>, scalar_prefetch = 0 : i64, scratch_operands = 3 : i64, tpu.core_type = #tpu.core_type<tc>, window_params = [{transform_indices = @transform_0, window_bounds = array<i64: 1, 128, 256>}, {transform_indices = @transform_1, window_bounds = array<i64: 512, 128>}, {transform_indices = @transform_2, window_bounds = array<i64: 1, 1, 256>}, {transform_indices = @transform_3, window_bounds = array<i64: 1, 1, 256>}]} {
    %c0_i32 = arith.constant 0 : i32
    %0 = arith.cmpi eq, %arg1, %c0_i32 : i32
    %1 = arith.extui %0 : i1 to i32
    %c0_i32_0 = arith.constant 0 : i32
    %2 = arith.cmpi ne, %1, %c0_i32_0 : i32
    scf.if %2 {
      %cst_30 = arith.constant 0xFF800000 : f32
      %52 = vector.broadcast %cst_30 : f32 to vector<1x256xf32>
      %c0_31 = arith.constant 0 : index
      %c0_32 = arith.constant 0 : index
      %53 = vector.load %arg6[%c0_31, %c0_32] : memref<1x256xf32, #tpu.memory_space<vmem>>, vector<1x256xf32>
      tpu.vector_store %arg6[%c0_31, %c0_32], %52 {strides = array<i32>} : memref<1x256xf32, #tpu.memory_space<vmem>>, vector<1x256xf32>,
      %cst_33 = arith.constant 0.000000e+00 : f32
      %54 = vector.broadcast %cst_33 : f32 to vector<1x256xf32>
      %c0_34 = arith.constant 0 : index
      %c0_35 = arith.constant 0 : index
      %55 = vector.load %arg7[%c0_34, %c0_35] : memref<1x256xf32, #tpu.memory_space<vmem>>, vector<1x256xf32>
      tpu.vector_store %arg7[%c0_34, %c0_35], %54 {strides = array<i32>} : memref<1x256xf32, #tpu.memory_space<vmem>>, vector<1x256xf32>,
      %cst_36 = arith.constant 0.000000e+00 : f32
      %56 = vector.broadcast %cst_36 : f32 to vector<1x256xf32>
      %c0_37 = arith.constant 0 : index
      %c0_38 = arith.constant 0 : index
      %57 = vector.load %arg8[%c0_37, %c0_38] : memref<1x256xf32, #tpu.memory_space<vmem>>, vector<1x256xf32>
      tpu.vector_store %arg8[%c0_37, %c0_38], %56 {strides = array<i32>} : memref<1x256xf32, #tpu.memory_space<vmem>>, vector<1x256xf32>,
    } else {
    }
    %c0 = arith.constant 0 : index
    %c0_1 = arith.constant 0 : index
    %3 = vector.load %arg3[%c0, %c0_1] : memref<512x128xbf16, #tpu.memory_space<vmem>>, vector<512x128xbf16>
    %c0_2 = arith.constant 0 : index
    %c0_3 = arith.constant 0 : index
    %c0_4 = arith.constant 0 : index
    %4 = vector.load %arg2[%c0_2, %c0_3, %c0_4] : memref<1x128x256xbf16, #tpu.memory_space<vmem>>, vector<1x128x256xbf16>
    %5 = vector.shape_cast %4 : vector<1x128x256xbf16> to vector<128x256xbf16>
    %cst = arith.constant dense<0.000000e+00> : vector<512x256xf32>
    %6 = tpu.matmul %3, %5, %cst {dimension_numbers = #tpu.dot_dimension_numbers<[1], [0], [0], [1], [0, 0, 1, 1], [], []>} : vector<512x128xbf16>, vector<128x256xbf16>, vector<512x256xf32> -> vector<512x256xf32>
    %c0_5 = arith.constant 0 : index
    %c0_6 = arith.constant 0 : index
    %c0_7 = arith.constant 0 : index
    %7 = vector.load %arg4[%c0_5, %c0_6, %c0_7] : memref<1x1x256xi32, #tpu.memory_space<vmem>>, vector<1x1x256xi32>
    %8 = vector.shape_cast %7 : vector<1x1x256xi32> to vector<1x256xi32>
    %9 = tpu.iota {dimensions = array<i32: 0>} : vector<512x1xi32>
    %c512_i32 = arith.constant 512 : i32
    %10 = arith.muli %arg1, %c512_i32 : i32
    %11 = vector.broadcast %10 : i32 to vector<512x1xi32>
    %12 = arith.addi %9, %11 : vector<512x1xi32>
    %c500_i32 = arith.constant 500 : i32
    %13 = vector.broadcast %c500_i32 : i32 to vector<512x1xi32>
    %14 = arith.cmpi slt, %12, %13 : vector<512x1xi32>
    %cst_8 = arith.constant 0xFF800000 : f32
    %15 = vector.shape_cast %14 : vector<512x1xi1> to vector<512x1xi1>
    %16 = vector.broadcast %15 : vector<512x1xi1> to vector<512x256xi1>
    %17 = vector.broadcast %cst_8 : f32 to vector<512x256xf32>
    %18 = arith.select %16, %6, %17 : vector<512x256xi1>, vector<512x256xf32>
    %c512_i32_9 = arith.constant 512 : i32
    %19 = arith.muli %arg1, %c512_i32_9 : i32
    %20 = vector.broadcast %19 : i32 to vector<1x256xi32>
    %21 = arith.subi %8, %20 : vector<1x256xi32>
    %c0_10 = arith.constant 0 : index
    %c0_11 = arith.constant 0 : index
    %22 = vector.load %arg8[%c0_10, %c0_11] : memref<1x256xf32, #tpu.memory_space<vmem>>, vector<1x256xf32>
    %23 = vector.broadcast %9 : vector<512x1xi32> to vector<512x256xi32>
    %24 = vector.broadcast %21 : vector<1x256xi32> to vector<512x256xi32>
    %25 = arith.cmpi eq, %23, %24 : vector<512x256xi32>
    %cst_12 = arith.constant 0.000000e+00 : f32
    %26 = vector.broadcast %cst_12 : f32 to vector<512x256xf32>
    %27 = arith.select %25, %18, %26 : vector<512x256xi1>, vector<512x256xf32>
    %cst_13 = arith.constant dense<0.000000e+00> : vector<256xf32>
    %28 = vector.multi_reduction <add>, %27, %cst_13 [0] : vector<512x256xf32> to vector<256xf32>
    %29 = vector.shape_cast %28 : vector<256xf32> to vector<1x256xf32>
    %30 = arith.addf %22, %29 : vector<1x256xf32>
    %c0_14 = arith.constant 0 : index
    %c0_15 = arith.constant 0 : index
    %31 = vector.load %arg8[%c0_14, %c0_15] : memref<1x256xf32, #tpu.memory_space<vmem>>, vector<1x256xf32>
    tpu.vector_store %arg8[%c0_14, %c0_15], %30 {strides = array<i32>} : memref<1x256xf32, #tpu.memory_space<vmem>>, vector<1x256xf32>,
    %c0_16 = arith.constant 0 : index
    %c0_17 = arith.constant 0 : index
    %32 = vector.load %arg6[%c0_16, %c0_17] : memref<1x256xf32, #tpu.memory_space<vmem>>, vector<1x256xf32>
    %cst_18 = arith.constant dense<0xFF800000> : vector<256xf32>
    %33 = vector.multi_reduction <maximumf>, %18, %cst_18 [0] : vector<512x256xf32> to vector<256xf32>
    %34 = vector.shape_cast %33 : vector<256xf32> to vector<1x256xf32>
    %35 = arith.maximumf %32, %34 : vector<1x256xf32>
    %c0_19 = arith.constant 0 : index
    %c0_20 = arith.constant 0 : index
    %36 = vector.load %arg7[%c0_19, %c0_20] : memref<1x256xf32, #tpu.memory_space<vmem>>, vector<1x256xf32>
    %c0_21 = arith.constant 0 : index
    %c0_22 = arith.constant 0 : index
    %37 = vector.load %arg6[%c0_21, %c0_22] : memref<1x256xf32, #tpu.memory_space<vmem>>, vector<1x256xf32>
    %38 = arith.subf %37, %35 : vector<1x256xf32>
    %39 = math.exp %38 : vector<1x256xf32>
    %40 = arith.mulf %36, %39 : vector<1x256xf32>
    %41 = vector.broadcast %35 : vector<1x256xf32> to vector<512x256xf32>
    %42 = arith.subf %18, %41 : vector<512x256xf32>
    %43 = math.exp %42 : vector<512x256xf32>
    %cst_23 = arith.constant dense<0.000000e+00> : vector<256xf32>
    %44 = vector.multi_reduction <add>, %43, %cst_23 [0] : vector<512x256xf32> to vector<256xf32>
    %45 = vector.shape_cast %44 : vector<256xf32> to vector<1x256xf32>
    %46 = arith.addf %40, %45 : vector<1x256xf32>
    %c0_24 = arith.constant 0 : index
    %c0_25 = arith.constant 0 : index
    %47 = vector.load %arg7[%c0_24, %c0_25] : memref<1x256xf32, #tpu.memory_space<vmem>>, vector<1x256xf32>
    tpu.vector_store %arg7[%c0_24, %c0_25], %46 {strides = array<i32>} : memref<1x256xf32, #tpu.memory_space<vmem>>, vector<1x256xf32>,
    %c0_26 = arith.constant 0 : index
    %c0_27 = arith.constant 0 : index
    %48 = vector.load %arg6[%c0_26, %c0_27] : memref<1x256xf32, #tpu.memory_space<vmem>>, vector<1x256xf32>
    tpu.vector_store %arg6[%c0_26, %c0_27], %35 {strides = array<i32>} : memref<1x256xf32, #tpu.memory_space<vmem>>, vector<1x256xf32>,
    %c0_i32_28 = arith.constant 0 : i32
    %49 = arith.cmpi eq, %arg1, %c0_i32_28 : i32
    %50 = arith.extui %49 : i1 to i32
    %c0_i32_29 = arith.constant 0 : i32
    %51 = arith.cmpi ne, %50, %c0_i32_29 : i32
    scf.if %51 {
      %c-100_i32 = arith.constant -100 : i32
      %52 = vector.broadcast %c-100_i32 : i32 to vector<1x256xi32>
      %53 = arith.cmpi ne, %8, %52 : vector<1x256xi32>
      %c0_30 = arith.constant 0 : index
      %c0_31 = arith.constant 0 : index
      %54 = vector.load %arg6[%c0_30, %c0_31] : memref<1x256xf32, #tpu.memory_space<vmem>>, vector<1x256xf32>
      %c0_32 = arith.constant 0 : index
      %c0_33 = arith.constant 0 : index
      %55 = vector.load %arg7[%c0_32, %c0_33] : memref<1x256xf32, #tpu.memory_space<vmem>>, vector<1x256xf32>
      %56 = math.log %55 : vector<1x256xf32>
      %57 = arith.addf %54, %56 : vector<1x256xf32>
      %c0_34 = arith.constant 0 : index
      %c0_35 = arith.constant 0 : index
      %58 = vector.load %arg8[%c0_34, %c0_35] : memref<1x256xf32, #tpu.memory_space<vmem>>, vector<1x256xf32>
      %59 = arith.subf %57, %58 : vector<1x256xf32>
      %cst_36 = arith.constant 0.000000e+00 : f32
      %60 = vector.broadcast %cst_36 : f32 to vector<1x256xf32>
      %61 = arith.select %53, %59, %60 : vector<1x256xi1>, vector<1x256xf32>
      %c0_37 = arith.constant 0 : index
      %c0_38 = arith.constant 0 : index
      %c0_39 = arith.constant 0 : index
      %62 = vector.load %arg5[%c0_37, %c0_38, %c0_39] : memref<1x1x256xf32, #tpu.memory_space<vmem>>, vector<1x1x256xf32>
      %63 = vector.shape_cast %62 : vector<1x1x256xf32> to vector<1x256xf32>
      %64 = vector.shape_cast %61 : vector<1x256xf32> to vector<1x1x256xf32>
      tpu.vector_store %arg5[%c0_37, %c0_38, %c0_39], %64 {strides = array<i32>} : memref<1x1x256xf32, #tpu.memory_space<vmem>>, vector<1x1x256xf32>,
    } else {
    }
    return
  }
  func.func @transform_0(%arg0: i32, %arg1: i32) -> (i32, i32, i32) {
    %c0_i32 = arith.constant 0 : i32
    %c0_i32_0 = arith.constant 0 : i32
    %c0_i32_1 = arith.constant 0 : i32
    return %arg0, %c0_i32, %c0_i32_0 : i32, i32, i32
  }
  func.func @transform_1(%arg0: i32, %arg1: i32) -> (i32, i32) {
    %c0_i32 = arith.constant 0 : i32
    %c0_i32_0 = arith.constant 0 : i32
    return %arg1, %c0_i32 : i32, i32
  }
  func.func @transform_2(%arg0: i32, %arg1: i32) -> (i32, i32, i32) {
    %c0_i32 = arith.constant 0 : i32
    %c0_i32_0 = arith.constant 0 : i32
    %c0_i32_1 = arith.constant 0 : i32
    return %arg0, %c0_i32, %c0_i32_0 : i32, i32, i32
  }
  func.func @transform_3(%arg0: i32, %arg1: i32) -> (i32, i32, i32) {
    %c0_i32 = arith.constant 0 : i32
    %c0_i32_0 = arith.constant 0 : i32
    %c0_i32_1 = arith.constant 0 : i32
    return %arg0, %c0_i32, %c0_i32_0 : i32, i32, i32
  }
}

</mosaic_0001>

<llo_original>
// kernel: tpu_custom_call.1
$region0: #{tpu_custom_call.1}
  #allocation0 [shape = 'u32[]', space=smem, size = 0x4, offset = 0x4, fixed_abs, tag = 'smem constant byte address 0x4 - core index']
  #allocation1 [shape = 'u32[144,128]{1,0:T(1,128)}', space=vmem, size = 0x12000, scoped, tag = 'internal scratch']
  #allocation2 [shape = 'f32[1,256]{1,0:T(1,128)}', space=vmem, size = 0x400, scoped, tag = 'scratch operand']
  #allocation3 [shape = 'f32[1,256]{1,0:T(1,128)}', space=vmem, size = 0x400, scoped, tag = 'scratch operand']
  #allocation4 [shape = 'f32[1,256]{1,0:T(1,128)}', space=vmem, size = 0x400, scoped, tag = 'scratch operand']
  %s0 = inlined_call_operand.hbm [shape: bf16[1,128,256], index: 0, kind: input, shape index: {}]
  %s1 = inlined_call_operand.hbm [shape: bf16[512,128], index: 1, kind: input, shape index: {}]
  %s2 = inlined_call_operand.vmem [shape: s32[1,1,256], index: 2, kind: input, shape index: {}]
  %s3 = inlined_call_operand.hbm [shape: f32[1,1,256], index: 3, kind: output, shape index: {}]
  %s4 = sld [smem:[#allocation0]]
  $region38: #{tpu_custom_call.1} parent=0
    _
  %s6 = ssub.s32 1, %s4
  %s7 = scalar_select 0, %s6, %s4
  $region1: #{tpu_custom_call.1} parent=0
    #allocation5 [shape = 'u8[65536]{0}', space=vmem, size = 0x10000, scoped, tag = 'input window, operand 0, single buffered']
    #allocation6 [shape = 's32[1]{0}', space=sflag, size = 0x4, scoped, tag = 'scoped memory for tpu_custom_call.1']
    #allocation7 [shape = 's32[1]{0}', space=sflag, size = 0x4, scoped, tag = 'scoped memory for tpu_custom_call.1']
    #allocation8 [shape = 'u8[131072]{0}', space=vmem, size = 0x20000, scoped, tag = 'input window, operand 1, single buffered']
    #allocation9 [shape = 's32[1]{0}', space=sflag, size = 0x4, scoped, tag = 'scoped memory for tpu_custom_call.1']
    #allocation10 [shape = 'u8[1024]{0}', space=vmem, size = 0x400, scoped, tag = 'output window, operand 0, single buffered']
    %8 = vsyncpa [#allocation6], 0
    %9 = vsyncpa [#allocation9], 0
    %10 = vsyncpa [#allocation7], 0
    // Predicated region
    $region2: #{tpu_custom_call.1} parent=1 // pred_check
      _
    $region3: #{tpu_custom_call.1} parent=1 // pred_check_branch
      %12 = sbr.rel (0) target = $region5
    $region4: #{tpu_custom_call.1} parent=1 // pred_region
      %s14 = ssub.s32 2048, 2048
      %15 = vsyncadd [#allocation6], %s14
      %s16 = sshll.u32 [#allocation5], 4
      %s17 = int_to_ptr.vmem [resolvable:$true] %s16
      %22 = dma.hbm_to_vmem [thread:$0]  %s0, 2048, %s17, [#allocation6], 128, 128, 8
    $region5: #{tpu_custom_call.1} parent=1 // pred_fallthru
      _
    // Predicated region
    $region6: #{tpu_custom_call.1} parent=1 // pred_check
      _
    $region7: #{tpu_custom_call.1} parent=1 // pred_check_branch
      %24 = sbr.rel (0) target = $region9
    $region8: #{tpu_custom_call.1} parent=1 // pred_region
      %s26 = ssub.s32 4096, 4096
      %27 = vsyncadd [#allocation9], %s26
      %s28 = sshll.u32 [#allocation8], 4
      %s29 = int_to_ptr.vmem [resolvable:$true] %s28
      %34 = dma.hbm_to_vmem [thread:$0]  %s1, 4096, %s29, [#allocation9], 64, 64, 4
    $region9: #{tpu_custom_call.1} parent=1 // pred_fallthru
      _
    // Predicated region
    $region10: #{tpu_custom_call.1} parent=1 // pred_check
      _
    $region11: #{tpu_custom_call.1} parent=1 // pred_check_branch
      %36 = sbr.rel (0) target = $region13
    $region12: #{tpu_custom_call.1} parent=1 // pred_region
      _
    $region13: #{tpu_custom_call.1} parent=1 // pred_fallthru
      _
    // Predicated region
    $region14: #{tpu_custom_call.1} parent=1 // pred_check
      _
    $region15: #{tpu_custom_call.1} parent=1 // pred_check_branch
      %38 = sbr.rel (0) target = $region17
    $region16: #{tpu_custom_call.1} parent=1 // pred_region
      %39 = dma.done [#allocation6], 2048
    $region17: #{tpu_custom_call.1} parent=1 // pred_fallthru
      _
    // Predicated region
    $region18: #{tpu_custom_call.1} parent=1 // pred_check
      _
    $region19: #{tpu_custom_call.1} parent=1 // pred_check_branch
      %41 = sbr.rel (0) target = $region21
    $region20: #{tpu_custom_call.1} parent=1 // pred_region
      %42 = dma.done [#allocation9], 4096
    $region21: #{tpu_custom_call.1} parent=1 // pred_fallthru
      _
    %p44 = scmp.eq.s32.totalorder 0, 0
    // Predicated region
    $region22: #{tpu_custom_call.1} parent=1 // pred_check
      %p45 = pneg %p44
    $region23: #{tpu_custom_call.1} parent=1 // pred_check_branch
      %47 = sbr.rel (%p45) target = $region25
    $region24: #{tpu_custom_call.1} parent=1 // pred_region
      %v48 = vlaneseq
      %vm49 = vcmp.ge.s32.totalorder %v48, 0
      %vm50 = vcmp.lt.s32.totalorder %v48, 256
      %vm51 = vmand %vm49, %vm50
      %52 = vst.msk [vmem:[#allocation2] sm:$0x3] %vm51, -inf
      %53 = vst.msk [vmem:[#allocation3] sm:$0x3] %vm51, 0.0
      %54 = vst.msk [vmem:[#allocation4] sm:$0x3] %vm51, 0.0
    $region25: #{tpu_custom_call.1} parent=1 // pred_fallthru
      _
    %v55 = vld [vmem:[#allocation8] sm:$0xf]
    %v56 = vld [vmem:[#allocation8 + $0x4] sm:$0xf]
    %v57 = vld [vmem:[#allocation8 + $0x8] sm:$0xf]
    %v58 = vld [vmem:[#allocation8 + $0xc] sm:$0xf]
    %v59 = vld [vmem:[#allocation8 + $0x10] sm:$0xf]
    %v60 = vld [vmem:[#allocation8 + $0x14] sm:$0xf]
    %v61 = vld [vmem:[#allocation8 + $0x18] sm:$0xf]
    %v62 = vld [vmem:[#allocation8 + $0x1c] sm:$0xf]
    %v63 = vld [vmem:[#allocation8 + $0x20] sm:$0xf]
    %v64 = vld [vmem:[#allocation8 + $0x24] sm:$0xf]
    %v65 = vld [vmem:[#allocation8 + $0x28] sm:$0xf]
    %v66 = vld [vmem:[#allocation8 + $0x2c] sm:$0xf]
    %v67 = vld [vmem:[#allocation8 + $0x30] sm:$0xf]
    %v68 = vld [vmem:[#allocation8 + $0x34] sm:$0xf]
    %v69 = vld [vmem:[#allocation8 + $0x38] sm:$0xf]
    %v70 = vld [vmem:[#allocation8 + $0x3c] sm:$0xf]
    %v71 = vld [vmem:[#allocation8 + $0x40] sm:$0xf]
    %v72 = vld [vmem:[#allocation8 + $0x44] sm:$0xf]
    %v73 = vld [vmem:[#allocation8 + $0x48] sm:$0xf]
    %v74 = vld [vmem:[#allocation8 + $0x4c] sm:$0xf]
    %v75 = vld [vmem:[#allocation8 + $0x50] sm:$0xf]
    %v76 = vld [vmem:[#allocation8 + $0x54] sm:$0xf]
    %v77 = vld [vmem:[#allocation8 + $0x58] sm:$0xf]
    %v78 = vld [vmem:[#allocation8 + $0x5c] sm:$0xf]
    %v79 = vld [vmem:[#allocation8 + $0x60] sm:$0xf]
    %v80 = vld [vmem:[#allocation8 + $0x64] sm:$0xf]
    %v81 = vld [vmem:[#allocation8 + $0x68] sm:$0xf]
    %v82 = vld [vmem:[#allocation8 + $0x6c] sm:$0xf]
    %v83 = vld [vmem:[#allocation8 + $0x70] sm:$0xf]
    %v84 = vld [vmem:[#allocation8 + $0x74] sm:$0xf]
    %v85 = vld [vmem:[#allocation8 + $0x78] sm:$0xf]
    %v86 = vld [vmem:[#allocation8 + $0x7c] sm:$0xf]
    %v87 = vld [vmem:[#allocation8 + $0x80] sm:$0xf]
    %v88 = vld [vmem:[#allocation8 + $0x84] sm:$0xf]
    %v89 = vld [vmem:[#allocation8 + $0x88] sm:$0xf]
    %v90 = vld [vmem:[#allocation8 + $0x8c] sm:$0xf]
    %v91 = vld [vmem:[#allocation8 + $0x90] sm:$0xf]
    %v92 = vld [vmem:[#allocation8 + $0x94] sm:$0xf]
    %v93 = vld [vmem:[#allocation8 + $0x98] sm:$0xf]
    %v94 = vld [vmem:[#allocation8 + $0x9c] sm:$0xf]
    %v95 = vld [vmem:[#allocation8 + $0xa0] sm:$0xf]
    %v96 = vld [vmem:[#allocation8 + $0xa4] sm:$0xf]
    %v97 = vld [vmem:[#allocation8 + $0xa8] sm:$0xf]
    %v98 = vld [vmem:[#allocation8 + $0xac] sm:$0xf]
    %v99 = vld [vmem:[#allocation8 + $0xb0] sm:$0xf]
    %v100 = vld [vmem:[#allocation8 + $0xb4] sm:$0xf]
    %v101 = vld [vmem:[#allocation8 + $0xb8] sm:$0xf]
    %v102 = vld [vmem:[#allocation8 + $0xbc] sm:$0xf]
    %v103 = vld [vmem:[#allocation8 + $0xc0] sm:$0xf]
    %v104 = vld [vmem:[#allocation8 + $0xc4] sm:$0xf]
    %v105 = vld [vmem:[#allocation8 + $0xc8] sm:$0xf]
    %v106 = vld [vmem:[#allocation8 + $0xcc] sm:$0xf]
    %v107 = vld [vmem:[#allocation8 + $0xd0] sm:$0xf]
    %v108 = vld [vmem:[#allocation8 + $0xd4] sm:$0xf]
    %v109 = vld [vmem:[#allocation8 + $0xd8] sm:$0xf]
    %v110 = vld [vmem:[#allocation8 + $0xdc] sm:$0xf]
    %v111 = vld [vmem:[#allocation8 + $0xe0] sm:$0xf]
    %v112 = vld [vmem:[#allocation8 + $0xe4] sm:$0xf]
    %v113 = vld [vmem:[#allocation8 + $0xe8] sm:$0xf]
    %v114 = vld [vmem:[#allocation8 + $0xec] sm:$0xf]
    %v115 = vld [vmem:[#allocation8 + $0xf0] sm:$0xf]
    %v116 = vld [vmem:[#allocation8 + $0xf4] sm:$0xf]
    %v117 = vld [vmem:[#allocation8 + $0xf8] sm:$0xf]
    %v118 = vld [vmem:[#allocation8 + $0xfc] sm:$0xf]
    %v119 = vld [vmem:[#allocation5] sm:$0xff]
    %v120 = vld [vmem:[#allocation5 + $0x8] sm:$0xff]
    %v121 = vld [vmem:[#allocation5 + $0x10] sm:$0xff]
    %v122 = vld [vmem:[#allocation5 + $0x18] sm:$0xff]
    %v123 = vld [vmem:[#allocation5 + $0x20] sm:$0xff]
    %v124 = vld [vmem:[#allocation5 + $0x28] sm:$0xff]
    %v125 = vld [vmem:[#allocation5 + $0x30] sm:$0xff]
    %v126 = vld [vmem:[#allocation5 + $0x38] sm:$0xff]
    %v127 = vld [vmem:[#allocation5 + $0x40] sm:$0xff]
    %v128 = vld [vmem:[#allocation5 + $0x48] sm:$0xff]
    %v129 = vld [vmem:[#allocation5 + $0x50] sm:$0xff]
    %v130 = vld [vmem:[#allocation5 + $0x58] sm:$0xff]
    %v131 = vld [vmem:[#allocation5 + $0x60] sm:$0xff]
    %v132 = vld [vmem:[#allocation5 + $0x68] sm:$0xff]
    %v133 = vld [vmem:[#allocation5 + $0x70] sm:$0xff]
    %v134 = vld [vmem:[#allocation5 + $0x78] sm:$0xff]
    %v199 = vunpack.c.l.b16 %v55
    %v200 = vunpack.c.l.b16 %v56
    %v201 = vunpack.c.l.b16 %v57
    %v202 = vunpack.c.l.b16 %v58
    %v203 = vunpack.c.l.b16 %v59
    %v204 = vunpack.c.l.b16 %v60
    %v205 = vunpack.c.l.b16 %v61
    %v206 = vunpack.c.l.b16 %v62
    %v207 = vunpack.c.l.b16 %v63
    %v208 = vunpack.c.l.b16 %v64
    %v209 = vunpack.c.l.b16 %v65
    %v210 = vunpack.c.l.b16 %v66
    %v211 = vunpack.c.l.b16 %v67
    %v212 = vunpack.c.l.b16 %v68
    %v213 = vunpack.c.l.b16 %v69
    %v214 = vunpack.c.l.b16 %v70
    %v215 = vunpack.c.l.b16 %v71
    %v216 = vunpack.c.l.b16 %v72
    %v217 = vunpack.c.l.b16 %v73
    %v218 = vunpack.c.l.b16 %v74
    %v219 = vunpack.c.l.b16 %v75
    %v220 = vunpack.c.l.b16 %v76
    %v221 = vunpack.c.l.b16 %v77
    %v222 = vunpack.c.l.b16 %v78
    %v223 = vunpack.c.l.b16 %v79
    %v224 = vunpack.c.l.b16 %v80
    %v225 = vunpack.c.l.b16 %v81
    %v226 = vunpack.c.l.b16 %v82
    %v227 = vunpack.c.l.b16 %v83
    %v228 = vunpack.c.l.b16 %v84
    %v229 = vunpack.c.l.b16 %v85
    %v230 = vunpack.c.l.b16 %v86
    %v231 = vunpack.c.l.b16 %v87
    %v232 = vunpack.c.l.b16 %v88
    %v233 = vunpack.c.l.b16 %v89
    %v234 = vunpack.c.l.b16 %v90
    %v235 = vunpack.c.l.b16 %v91
    %v236 = vunpack.c.l.b16 %v92
    %v237 = vunpack.c.l.b16 %v93
    %v238 = vunpack.c.l.b16 %v94
    %v239 = vunpack.c.l.b16 %v95
    %v240 = vunpack.c.l.b16 %v96
    %v241 = vunpack.c.l.b16 %v97
    %v242 = vunpack.c.l.b16 %v98
    %v243 = vunpack.c.l.b16 %v99
    %v244 = vunpack.c.l.b16 %v100
    %v245 = vunpack.c.l.b16 %v101
    %v246 = vunpack.c.l.b16 %v102
    %v247 = vunpack.c.l.b16 %v103
    %v248 = vunpack.c.l.b16 %v104
    %v249 = vunpack.c.l.b16 %v105
    %v250 = vunpack.c.l.b16 %v106
    %v251 = vunpack.c.l.b16 %v107
    %v252 = vunpack.c.l.b16 %v108
    %v253 = vunpack.c.l.b16 %v109
    %v254 = vunpack.c.l.b16 %v110
    %v255 = vunpack.c.l.b16 %v111
    %v256 = vunpack.c.l.b16 %v112
    %v257 = vunpack.c.l.b16 %v113
    %v258 = vunpack.c.l.b16 %v114
    %v259 = vunpack.c.l.b16 %v115
    %v260 = vunpack.c.l.b16 %v116
    %v261 = vunpack.c.l.b16 %v117
    %v262 = vunpack.c.l.b16 %v118
    %v263 = vpack.c.b16 %v200, %v199
    %v264 = vpack.c.b16 %v202, %v201
    %v265 = vpack.c.b16 %v204, %v203
    %v266 = vpack.c.b16 %v206, %v205
    %v267 = vpack.c.b16 %v208, %v207
    %v268 = vpack.c.b16 %v210, %v209
    %v269 = vpack.c.b16 %v212, %v211
    %v270 = vpack.c.b16 %v214, %v213
    %v271 = vpack.c.b16 %v216, %v215
    %v272 = vpack.c.b16 %v218, %v217
    %v273 = vpack.c.b16 %v220, %v219
    %v274 = vpack.c.b16 %v222, %v221
    %v275 = vpack.c.b16 %v224, %v223
    %v276 = vpack.c.b16 %v226, %v225
    %v277 = vpack.c.b16 %v228, %v227
    %v278 = vpack.c.b16 %v230, %v229
    %v279 = vpack.c.b16 %v232, %v231
    %v280 = vpack.c.b16 %v234, %v233
    %v281 = vpack.c.b16 %v236, %v235
    %v282 = vpack.c.b16 %v238, %v237
    %v283 = vpack.c.b16 %v240, %v239
    %v284 = vpack.c.b16 %v242, %v241
    %v285 = vpack.c.b16 %v244, %v243
    %v286 = vpack.c.b16 %v246, %v245
    %v287 = vpack.c.b16 %v248, %v247
    %v288 = vpack.c.b16 %v250, %v249
    %v289 = vpack.c.b16 %v252, %v251
    %v290 = vpack.c.b16 %v254, %v253
    %v291 = vpack.c.b16 %v256, %v255
    %v292 = vpack.c.b16 %v258, %v257
    %v293 = vpack.c.b16 %v260, %v259
    %v294 = vpack.c.b16 %v262, %v261
    %v343 = vunpack.c.l.b16 %v119
    %v344 = vunpack.c.h.b16 %v119
    %v345 = vunpack.c.l.b16 %v120
    %v346 = vunpack.c.h.b16 %v120
    %v347 = vunpack.c.l.b16 %v121
    %v348 = vunpack.c.h.b16 %v121
    %v349 = vunpack.c.l.b16 %v122
    %v350 = vunpack.c.h.b16 %v122
    %v351 = vunpack.c.l.b16 %v123
    %v352 = vunpack.c.h.b16 %v123
    %v353 = vunpack.c.l.b16 %v124
    %v354 = vunpack.c.h.b16 %v124
    %v355 = vunpack.c.l.b16 %v125
    %v356 = vunpack.c.h.b16 %v125
    %v357 = vunpack.c.l.b16 %v126
    %v358 = vunpack.c.h.b16 %v126
    %v359 = vunpack.c.l.b16 %v127
    %v360 = vunpack.c.h.b16 %v127
    %v361 = vunpack.c.l.b16 %v128
    %v362 = vunpack.c.h.b16 %v128
    %v363 = vunpack.c.l.b16 %v129
    %v364 = vunpack.c.h.b16 %v129
    %v365 = vunpack.c.l.b16 %v130
    %v366 = vunpack.c.h.b16 %v130
    %v367 = vunpack.c.l.b16 %v131
    %v368 = vunpack.c.h.b16 %v131
    %v369 = vunpack.c.l.b16 %v132
    %v370 = vunpack.c.h.b16 %v132
    %v371 = vunpack.c.l.b16 %v133
    %v372 = vunpack.c.h.b16 %v133
    %v373 = vunpack.c.l.b16 %v134
    %v374 = vunpack.c.h.b16 %v134
    %v375 = vpack.c.b16 %v345, %v343
    %v376 = vpack.c.b16 %v346, %v344
    %v377 = vpack.c.b16 %v349, %v347
    %v378 = vpack.c.b16 %v350, %v348
    %v379 = vpack.c.b16 %v353, %v351
    %v380 = vpack.c.b16 %v354, %v352
    %v381 = vpack.c.b16 %v357, %v355
    %v382 = vpack.c.b16 %v358, %v356
    %v383 = vpack.c.b16 %v361, %v359
    %v384 = vpack.c.b16 %v362, %v360
    %v385 = vpack.c.b16 %v365, %v363
    %v386 = vpack.c.b16 %v366, %v364
    %v387 = vpack.c.b16 %v369, %v367
    %v388 = vpack.c.b16 %v370, %v368
    %v389 = vpack.c.b16 %v373, %v371
    %v390 = vpack.c.b16 %v374, %v372
    %407 = vmatprep.subr.bf16.mxu0 %v376
    %408 = vmatpush1.bf16.msra.mxu0 %v375
    %409 = vmatprep.subr.bf16.mxu0 %v378
    %410 = vmatpush1.bf16.msra.mxu0 %v377
    %411 = vmatprep.subr.bf16.mxu0 %v380
    %412 = vmatpush1.bf16.msra.mxu0 %v379
    %413 = vmatprep.subr.bf16.mxu0 %v382
    %414 = vmatpush1.bf16.msra.mxu0 %v381
    %415 = vmatprep.subr.bf16.mxu0 %v384
    %416 = vmatpush1.bf16.msra.mxu0 %v383
    %417 = vmatprep.subr.bf16.mxu0 %v386
    %418 = vmatpush1.bf16.msra.mxu0 %v385
    %419 = vmatprep.subr.bf16.mxu0 %v388
    %420 = vmatpush1.bf16.msra.mxu0 %v387
    %421 = vmatprep.subr.bf16.mxu0 %v390
    %422 = vmatpush1.bf16.msra.mxu0 %v389
    %423 = vmatprep.subr.bf16.mxu0 0
    %424 = vmatpush1.bf16.msra.mxu0 0
    %425 = vmatprep.subr.bf16.mxu0 0
    %426 = vmatpush1.bf16.msra.mxu0 0
    %427 = vmatprep.subr.bf16.mxu0 0
    %428 = vmatpush1.bf16.msra.mxu0 0
    %429 = vmatprep.subr.bf16.mxu0 0
    %430 = vmatpush1.bf16.msra.mxu0 0
    %431 = vmatprep.subr.bf16.mxu0 0
    %432 = vmatpush1.bf16.msra.mxu0 0
    %433 = vmatprep.subr.bf16.mxu0 0
    %434 = vmatpush1.bf16.msra.mxu0 0
    %435 = vmatprep.subr.bf16.mxu0 0
    %436 = vmatpush1.bf16.msra.mxu0 0
    %437 = vmatprep.subr.bf16.mxu0 0
    %438 = vmatpush1.bf16.msra.mxu0 0
    %439 = vmatprep.mubr.bf16.mxu0 0
    %440 = vmatmul.mubr.bf16.gmra.mrb[0].mxu0 %v263
    %v441 = vpop.f32.mrb[0].mxu0
    %v442 = vadd.f32 0.0, %v441
    %v443 = vpop.f32.mrb[0].mxu0
    %v444 = vadd.f32 0.0, %v443
    %v445 = vpop.f32.mrb[0].mxu0
    %v446 = vadd.f32 0.0, %v445
    %v447 = vpop.f32.mrb[0].mxu0
    %v448 = vadd.f32 0.0, %v447
    %449 = vmatprep.mubr.bf16.mxu0 0
    %450 = vmatmul.mubr.bf16.gmra.mrb[0].mxu0 %v264
    %v451 = vpop.f32.mrb[0].mxu0
    %v452 = vadd.f32 0.0, %v451
    %v453 = vpop.f32.mrb[0].mxu0
    %v454 = vadd.f32 0.0, %v453
    %v455 = vpop.f32.mrb[0].mxu0
    %v456 = vadd.f32 0.0, %v455
    %v457 = vpop.f32.mrb[0].mxu0
    %v458 = vadd.f32 0.0, %v457
    %459 = vmatprep.mubr.bf16.mxu0 0
    %460 = vmatmul.mubr.bf16.gmra.mrb[0].mxu0 %v265
    %v461 = vpop.f32.mrb[0].mxu0
    %v462 = vadd.f32 0.0, %v461
    %v463 = vpop.f32.mrb[0].mxu0
    %v464 = vadd.f32 0.0, %v463
    %v465 = vpop.f32.mrb[0].mxu0
    %v466 = vadd.f32 0.0, %v465
    %v467 = vpop.f32.mrb[0].mxu0
    %v468 = vadd.f32 0.0, %v467
    %469 = vmatprep.mubr.bf16.mxu0 0
    %470 = vmatmul.mubr.bf16.gmra.mrb[0].mxu0 %v266
    %v471 = vpop.f32.mrb[0].mxu0
    %v472 = vadd.f32 0.0, %v471
    %v473 = vpop.f32.mrb[0].mxu0
    %v474 = vadd.f32 0.0, %v473
    %v475 = vpop.f32.mrb[0].mxu0
    %v476 = vadd.f32 0.0, %v475
    %v477 = vpop.f32.mrb[0].mxu0
    %v478 = vadd.f32 0.0, %v477
    %479 = vmatprep.mubr.bf16.mxu0 0
    %480 = vmatmul.mubr.bf16.gmra.mrb[0].mxu0 %v267
    %v481 = vpop.f32.mrb[0].mxu0
    %v482 = vadd.f32 0.0, %v481
    %v483 = vpop.f32.mrb[0].mxu0
    %v484 = vadd.f32 0.0, %v483
    %v485 = vpop.f32.mrb[0].mxu0
    %v486 = vadd.f32 0.0, %v485
    %v487 = vpop.f32.mrb[0].mxu0
    %v488 = vadd.f32 0.0, %v487
    %489 = vmatprep.mubr.bf16.mxu0 0
    %490 = vmatmul.mubr.bf16.gmra.mrb[0].mxu0 %v268
    %v491 = vpop.f32.mrb[0].mxu0
    %v492 = vadd.f32 0.0, %v491
    %v493 = vpop.f32.mrb[0].mxu0
    %v494 = vadd.f32 0.0, %v493
    %v495 = vpop.f32.mrb[0].mxu0
    %v496 = vadd.f32 0.0, %v495
    %v497 = vpop.f32.mrb[0].mxu0
    %v498 = vadd.f32 0.0, %v497
    %499 = vmatprep.mubr.bf16.mxu0 0
    %500 = vmatmul.mubr.bf16.gmra.mrb[0].mxu0 %v269
    %v501 = vpop.f32.mrb[0].mxu0
    %v502 = vadd.f32 0.0, %v501
    %v503 = vpop.f32.mrb[0].mxu0
    %v504 = vadd.f32 0.0, %v503
    %v505 = vpop.f32.mrb[0].mxu0
    %v506 = vadd.f32 0.0, %v505
    %v507 = vpop.f32.mrb[0].mxu0
    %v508 = vadd.f32 0.0, %v507
    %509 = vmatprep.mubr.bf16.mxu0 0
    %510 = vmatmul.mubr.bf16.gmra.mrb[0].mxu0 %v270
    %v511 = vpop.f32.mrb[0].mxu0
    %v512 = vadd.f32 0.0, %v511
    %v513 = vpop.f32.mrb[0].mxu0
    %v514 = vadd.f32 0.0, %v513
    %v515 = vpop.f32.mrb[0].mxu0
    %v516 = vadd.f32 0.0, %v515
    %v517 = vpop.f32.mrb[0].mxu0
    %v518 = vadd.f32 0.0, %v517
    %519 = vmatprep.mubr.bf16.mxu0 0
    %520 = vmatmul.mubr.bf16.gmra.mrb[0].mxu0 %v271
    %v521 = vpop.f32.mrb[0].mxu0
    %v522 = vadd.f32 0.0, %v521
    %v523 = vpop.f32.mrb[0].mxu0
    %v524 = vadd.f32 0.0, %v523
    %v525 = vpop.f32.mrb[0].mxu0
    %v526 = vadd.f32 0.0, %v525
    %v527 = vpop.f32.mrb[0].mxu0
    %v528 = vadd.f32 0.0, %v527
    %529 = vmatprep.mubr.bf16.mxu0 0
    %530 = vmatmul.mubr.bf16.gmra.mrb[0].mxu0 %v272
    %v531 = vpop.f32.mrb[0].mxu0
    %v532 = vadd.f32 0.0, %v531
    %v533 = vpop.f32.mrb[0].mxu0
    %v534 = vadd.f32 0.0, %v533
    %v535 = vpop.f32.mrb[0].mxu0
    %v536 = vadd.f32 0.0, %v535
    %v537 = vpop.f32.mrb[0].mxu0
    %v538 = vadd.f32 0.0, %v537
    %539 = vmatprep.mubr.bf16.mxu0 0
    %540 = vmatmul.mubr.bf16.gmra.mrb[0].mxu0 %v273
    %v541 = vpop.f32.mrb[0].mxu0
    %v542 = vadd.f32 0.0, %v541
    %v543 = vpop.f32.mrb[0].mxu0
    %v544 = vadd.f32 0.0, %v543
    %v545 = vpop.f32.mrb[0].mxu0
    %v546 = vadd.f32 0.0, %v545
    %v547 = vpop.f32.mrb[0].mxu0
    %v548 = vadd.f32 0.0, %v547
    %549 = vmatprep.mubr.bf16.mxu0 0
    %550 = vmatmul.mubr.bf16.gmra.mrb[0].mxu0 %v274
    %v551 = vpop.f32.mrb[0].mxu0
    %v552 = vadd.f32 0.0, %v551
    %v553 = vpop.f32.mrb[0].mxu0
    %v554 = vadd.f32 0.0, %v553
    %v555 = vpop.f32.mrb[0].mxu0
    %v556 = vadd.f32 0.0, %v555
    %v557 = vpop.f32.mrb[0].mxu0
    %v558 = vadd.f32 0.0, %v557
    %559 = vmatprep.mubr.bf16.mxu0 0
    %560 = vmatmul.mubr.bf16.gmra.mrb[0].mxu0 %v275
    %v561 = vpop.f32.mrb[0].mxu0
    %v562 = vadd.f32 0.0, %v561
    %v563 = vpop.f32.mrb[0].mxu0
    %v564 = vadd.f32 0.0, %v563
    %v565 = vpop.f32.mrb[0].mxu0
    %v566 = vadd.f32 0.0, %v565
    %v567 = vpop.f32.mrb[0].mxu0
    %v568 = vadd.f32 0.0, %v567
    %569 = vmatprep.mubr.bf16.mxu0 0
    %570 = vmatmul.mubr.bf16.gmra.mrb[0].mxu0 %v276
    %v571 = vpop.f32.mrb[0].mxu0
    %v572 = vadd.f32 0.0, %v571
    %v573 = vpop.f32.mrb[0].mxu0
    %v574 = vadd.f32 0.0, %v573
    %v575 = vpop.f32.mrb[0].mxu0
    %v576 = vadd.f32 0.0, %v575
    %v577 = vpop.f32.mrb[0].mxu0
    %v578 = vadd.f32 0.0, %v577
    %579 = vmatprep.mubr.bf16.mxu0 0
    %580 = vmatmul.mubr.bf16.gmra.mrb[0].mxu0 %v277
    %v581 = vpop.f32.mrb[0].mxu0
    %v582 = vadd.f32 0.0, %v581
    %v583 = vpop.f32.mrb[0].mxu0
    %v584 = vadd.f32 0.0, %v583
    %v585 = vpop.f32.mrb[0].mxu0
    %v586 = vadd.f32 0.0, %v585
    %v587 = vpop.f32.mrb[0].mxu0
    %v588 = vadd.f32 0.0, %v587
    %589 = vmatprep.mubr.bf16.mxu0 0
    %590 = vmatmul.mubr.bf16.gmra.mrb[0].mxu0 %v278
    %v591 = vpop.f32.mrb[0].mxu0
    %v592 = vadd.f32 0.0, %v591
    %v593 = vpop.f32.mrb[0].mxu0
    %v594 = vadd.f32 0.0, %v593
    %v595 = vpop.f32.mrb[0].mxu0
    %v596 = vadd.f32 0.0, %v595
    %v597 = vpop.f32.mrb[0].mxu0
    %v598 = vadd.f32 0.0, %v597
    %599 = vmatprep.mubr.bf16.mxu0 0
    %600 = vmatmul.mubr.bf16.gmra.mrb[0].mxu0 %v279
    %v601 = vpop.f32.mrb[0].mxu0
    %v602 = vadd.f32 0.0, %v601
    %v603 = vpop.f32.mrb[0].mxu0
    %v604 = vadd.f32 0.0, %v603
    %v605 = vpop.f32.mrb[0].mxu0
    %v606 = vadd.f32 0.0, %v605
    %v607 = vpop.f32.mrb[0].mxu0
    %v608 = vadd.f32 0.0, %v607
    %609 = vmatprep.mubr.bf16.mxu0 0
    %610 = vmatmul.mubr.bf16.gmra.mrb[0].mxu0 %v280
    %v611 = vpop.f32.mrb[0].mxu0
    %v612 = vadd.f32 0.0, %v611
    %v613 = vpop.f32.mrb[0].mxu0
    %v614 = vadd.f32 0.0, %v613
    %v615 = vpop.f32.mrb[0].mxu0
    %v616 = vadd.f32 0.0, %v615
    %v617 = vpop.f32.mrb[0].mxu0
    %v618 = vadd.f32 0.0, %v617
    %619 = vmatprep.mubr.bf16.mxu0 0
    %620 = vmatmul.mubr.bf16.gmra.mrb[0].mxu0 %v281
    %v621 = vpop.f32.mrb[0].mxu0
    %v622 = vadd.f32 0.0, %v621
    %v623 = vpop.f32.mrb[0].mxu0
    %v624 = vadd.f32 0.0, %v623
    %v625 = vpop.f32.mrb[0].mxu0
    %v626 = vadd.f32 0.0, %v625
    %v627 = vpop.f32.mrb[0].mxu0
    %v628 = vadd.f32 0.0, %v627
    %629 = vmatprep.mubr.bf16.mxu0 0
    %630 = vmatmul.mubr.bf16.gmra.mrb[0].mxu0 %v282
    %v631 = vpop.f32.mrb[0].mxu0
    %v632 = vadd.f32 0.0, %v631
    %v633 = vpop.f32.mrb[0].mxu0
    %v634 = vadd.f32 0.0, %v633
    %v635 = vpop.f32.mrb[0].mxu0
    %v636 = vadd.f32 0.0, %v635
    %v637 = vpop.f32.mrb[0].mxu0
    %v638 = vadd.f32 0.0, %v637
    %639 = vmatprep.mubr.bf16.mxu0 0
    %640 = vmatmul.mubr.bf16.gmra.mrb[0].mxu0 %v283
    %v641 = vpop.f32.mrb[0].mxu0
    %v642 = vadd.f32 0.0, %v641
    %v643 = vpop.f32.mrb[0].mxu0
    %v644 = vadd.f32 0.0, %v643
    %v645 = vpop.f32.mrb[0].mxu0
    %v646 = vadd.f32 0.0, %v645
    %v647 = vpop.f32.mrb[0].mxu0
    %v648 = vadd.f32 0.0, %v647
    %649 = vmatprep.mubr.bf16.mxu0 0
    %650 = vmatmul.mubr.bf16.gmra.mrb[0].mxu0 %v284
    %v651 = vpop.f32.mrb[0].mxu0
    %v652 = vadd.f32 0.0, %v651
    %v653 = vpop.f32.mrb[0].mxu0
    %v654 = vadd.f32 0.0, %v653
    %v655 = vpop.f32.mrb[0].mxu0
    %v656 = vadd.f32 0.0, %v655
    %v657 = vpop.f32.mrb[0].mxu0
    %v658 = vadd.f32 0.0, %v657
    %659 = vmatprep.mubr.bf16.mxu0 0
    %660 = vmatmul.mubr.bf16.gmra.mrb[0].mxu0 %v285
    %v661 = vpop.f32.mrb[0].mxu0
    %v662 = vadd.f32 0.0, %v661
    %v663 = vpop.f32.mrb[0].mxu0
    %v664 = vadd.f32 0.0, %v663
    %v665 = vpop.f32.mrb[0].mxu0
    %v666 = vadd.f32 0.0, %v665
    %v667 = vpop.f32.mrb[0].mxu0
    %v668 = vadd.f32 0.0, %v667
    %669 = vmatprep.mubr.bf16.mxu0 0
    %670 = vmatmul.mubr.bf16.gmra.mrb[0].mxu0 %v286
    %v671 = vpop.f32.mrb[0].mxu0
    %v672 = vadd.f32 0.0, %v671
    %v673 = vpop.f32.mrb[0].mxu0
    %v674 = vadd.f32 0.0, %v673
    %v675 = vpop.f32.mrb[0].mxu0
    %v676 = vadd.f32 0.0, %v675
    %v677 = vpop.f32.mrb[0].mxu0
    %v678 = vadd.f32 0.0, %v677
    %679 = vmatprep.mubr.bf16.mxu0 0
    %680 = vmatmul.mubr.bf16.gmra.mrb[0].mxu0 %v287
    %v681 = vpop.f32.mrb[0].mxu0
    %v682 = vadd.f32 0.0, %v681
    %v683 = vpop.f32.mrb[0].mxu0
    %v684 = vadd.f32 0.0, %v683
    %v685 = vpop.f32.mrb[0].mxu0
    %v686 = vadd.f32 0.0, %v685
    %v687 = vpop.f32.mrb[0].mxu0
    %v688 = vadd.f32 0.0, %v687
    %689 = vmatprep.mubr.bf16.mxu0 0
    %690 = vmatmul.mubr.bf16.gmra.mrb[0].mxu0 %v288
    %v691 = vpop.f32.mrb[0].mxu0
    %v692 = vadd.f32 0.0, %v691
    %v693 = vpop.f32.mrb[0].mxu0
    %v694 = vadd.f32 0.0, %v693
    %v695 = vpop.f32.mrb[0].mxu0
    %v696 = vadd.f32 0.0, %v695
    %v697 = vpop.f32.mrb[0].mxu0
    %v698 = vadd.f32 0.0, %v697
    %699 = vmatprep.mubr.bf16.mxu0 0
    %700 = vmatmul.mubr.bf16.gmra.mrb[0].mxu0 %v289
    %v701 = vpop.f32.mrb[0].mxu0
    %v702 = vadd.f32 0.0, %v701
    %v703 = vpop.f32.mrb[0].mxu0
    %v704 = vadd.f32 0.0, %v703
    %v705 = vpop.f32.mrb[0].mxu0
    %v706 = vadd.f32 0.0, %v705
    %v707 = vpop.f32.mrb[0].mxu0
    %v708 = vadd.f32 0.0, %v707
    %709 = vmatprep.mubr.bf16.mxu0 0
    %710 = vmatmul.mubr.bf16.gmra.mrb[0].mxu0 %v290
    %v711 = vpop.f32.mrb[0].mxu0
    %v712 = vadd.f32 0.0, %v711
    %v713 = vpop.f32.mrb[0].mxu0
    %v714 = vadd.f32 0.0, %v713
    %v715 = vpop.f32.mrb[0].mxu0
    %v716 = vadd.f32 0.0, %v715
    %v717 = vpop.f32.mrb[0].mxu0
    %v718 = vadd.f32 0.0, %v717
    %719 = vmatprep.mubr.bf16.mxu0 0
    %720 = vmatmul.mubr.bf16.gmra.mrb[0].mxu0 %v291
    %v721 = vpop.f32.mrb[0].mxu0
    %v722 = vadd.f32 0.0, %v721
    %v723 = vpop.f32.mrb[0].mxu0
    %v724 = vadd.f32 0.0, %v723
    %v725 = vpop.f32.mrb[0].mxu0
    %v726 = vadd.f32 0.0, %v725
    %v727 = vpop.f32.mrb[0].mxu0
    %v728 = vadd.f32 0.0, %v727
    %729 = vmatprep.mubr.bf16.mxu0 0
    %730 = vmatmul.mubr.bf16.gmra.mrb[0].mxu0 %v292
    %v731 = vpop.f32.mrb[0].mxu0
    %v732 = vadd.f32 0.0, %v731
    %v733 = vpop.f32.mrb[0].mxu0
    %v734 = vadd.f32 0.0, %v733
    %v735 = vpop.f32.mrb[0].mxu0
    %v736 = vadd.f32 0.0, %v735
    %v737 = vpop.f32.mrb[0].mxu0
    %v738 = vadd.f32 0.0, %v737
    %739 = vmatprep.mubr.bf16.mxu0 0
    %740 = vmatmul.mubr.bf16.gmra.mrb[0].mxu0 %v293
    %v741 = vpop.f32.mrb[0].mxu0
    %v742 = vadd.f32 0.0, %v741
    %v743 = vpop.f32.mrb[0].mxu0
    %v744 = vadd.f32 0.0, %v743
    %v745 = vpop.f32.mrb[0].mxu0
    %v746 = vadd.f32 0.0, %v745
    %v747 = vpop.f32.mrb[0].mxu0
    %v748 = vadd.f32 0.0, %v747
    %749 = vmatprep.mubr.bf16.mxu0 0
    %750 = vmatmul.mubr.bf16.gmra.mrb[0].mxu0 %v294
    %v751 = vpop.f32.mrb[0].mxu0
    %v752 = vadd.f32 0.0, %v751
    %v753 = vpop.f32.mrb[0].mxu0
    %v754 = vadd.f32 0.0, %v753
    %v755 = vpop.f32.mrb[0].mxu0
    %v756 = vadd.f32 0.0, %v755
    %v757 = vpop.f32.mrb[0].mxu0
    %v758 = vadd.f32 0.0, %v757
    %759 = vdwg.mxu0
    %v760 = vld [vmem:[%s2] sm:$0x3]
    %v761 = vlaneseq
    %v762 = vshrl.u32 %v761, 7
    %v763 = vadd.s32 %v762, 8
    %v764 = vadd.s32 %v762, 16
    %v765 = vadd.s32 %v762, 24
    %v766 = vadd.s32 %v762, 32
    %v767 = vadd.s32 %v762, 40
    %v768 = vadd.s32 %v762, 48
    %v769 = vadd.s32 %v762, 56
    %v770 = vadd.s32 %v762, 64
    %v771 = vadd.s32 %v762, 72
    %v772 = vadd.s32 %v762, 80
    %v773 = vadd.s32 %v762, 88
    %v774 = vadd.s32 %v762, 96
    %v775 = vadd.s32 %v762, 104
    %v776 = vadd.s32 %v762, 112
    %v777 = vadd.s32 %v762, 120
    %v778 = vadd.s32 %v762, 128
    %v779 = vadd.s32 %v762, 136
    %v780 = vadd.s32 %v762, 144
    %v781 = vadd.s32 %v762, 152
    %v782 = vadd.s32 %v762, 160
    %v783 = vadd.s32 %v762, 168
    %v784 = vadd.s32 %v762, 176
    %v785 = vadd.s32 %v762, 184
    %v786 = vadd.s32 %v762, 192
    %v787 = vadd.s32 %v762, 200
    %v788 = vadd.s32 %v762, 208
    %v789 = vadd.s32 %v762, 216
    %v790 = vadd.s32 %v762, 224
    %v791 = vadd.s32 %v762, 232
    %v792 = vadd.s32 %v762, 240
    %v793 = vadd.s32 %v762, 248
    %v794 = vadd.s32 %v762, 256
    %v795 = vadd.s32 %v762, 264
    %v796 = vadd.s32 %v762, 272
    %v797 = vadd.s32 %v762, 280
    %v798 = vadd.s32 %v762, 288
    %v799 = vadd.s32 %v762, 296
    %v800 = vadd.s32 %v762, 304
    %v801 = vadd.s32 %v762, 312
    %v802 = vadd.s32 %v762, 320
    %v803 = vadd.s32 %v762, 328
    %v804 = vadd.s32 %v762, 336
    %v805 = vadd.s32 %v762, 344
    %v806 = vadd.s32 %v762, 352
    %v807 = vadd.s32 %v762, 360
    %v808 = vadd.s32 %v762, 368
    %v809 = vadd.s32 %v762, 376
    %v810 = vadd.s32 %v762, 384
    %v811 = vadd.s32 %v762, 392
    %v812 = vadd.s32 %v762, 400
    %v813 = vadd.s32 %v762, 408
    %v814 = vadd.s32 %v762, 416
    %v815 = vadd.s32 %v762, 424
    %v816 = vadd.s32 %v762, 432
    %v817 = vadd.s32 %v762, 440
    %v818 = vadd.s32 %v762, 448
    %v819 = vadd.s32 %v762, 456
    %v820 = vadd.s32 %v762, 464
    %v821 = vadd.s32 %v762, 472
    %v822 = vadd.s32 %v762, 480
    %v823 = vadd.s32 %v762, 488
    %v824 = vadd.s32 %v762, 496
    %v825 = vadd.s32 %v762, 504
    %s826 = smul.u32 0, 512
    %v827 = vstv %s826
    %v828 = vadd.s32 %v762, %v827
    %v829 = vadd.s32 %v763, %v827
    %v830 = vadd.s32 %v764, %v827
    %v831 = vadd.s32 %v765, %v827
    %v832 = vadd.s32 %v766, %v827
    %v833 = vadd.s32 %v767, %v827
    %v834 = vadd.s32 %v768, %v827
    %v835 = vadd.s32 %v769, %v827
    %v836 = vadd.s32 %v770, %v827
    %v837 = vadd.s32 %v771, %v827
    %v838 = vadd.s32 %v772, %v827
    %v839 = vadd.s32 %v773, %v827
    %v840 = vadd.s32 %v774, %v827
    %v841 = vadd.s32 %v775, %v827
    %v842 = vadd.s32 %v776, %v827
    %v843 = vadd.s32 %v777, %v827
    %v844 = vadd.s32 %v778, %v827
    %v845 = vadd.s32 %v779, %v827
    %v846 = vadd.s32 %v780, %v827
    %v847 = vadd.s32 %v781, %v827
    %v848 = vadd.s32 %v782, %v827
    %v849 = vadd.s32 %v783, %v827
    %v850 = vadd.s32 %v784, %v827
    %v851 = vadd.s32 %v785, %v827
    %v852 = vadd.s32 %v786, %v827
    %v853 = vadd.s32 %v787, %v827
    %v854 = vadd.s32 %v788, %v827
    %v855 = vadd.s32 %v789, %v827
    %v856 = vadd.s32 %v790, %v827
    %v857 = vadd.s32 %v791, %v827
    %v858 = vadd.s32 %v792, %v827
    %v859 = vadd.s32 %v793, %v827
    %v860 = vadd.s32 %v794, %v827
    %v861 = vadd.s32 %v795, %v827
    %v862 = vadd.s32 %v796, %v827
    %v863 = vadd.s32 %v797, %v827
    %v864 = vadd.s32 %v798, %v827
    %v865 = vadd.s32 %v799, %v827
    %v866 = vadd.s32 %v800, %v827
    %v867 = vadd.s32 %v801, %v827
    %v868 = vadd.s32 %v802, %v827
    %v869 = vadd.s32 %v803, %v827
    %v870 = vadd.s32 %v804, %v827
    %v871 = vadd.s32 %v805, %v827
    %v872 = vadd.s32 %v806, %v827
    %v873 = vadd.s32 %v807, %v827
    %v874 = vadd.s32 %v808, %v827
    %v875 = vadd.s32 %v809, %v827
    %v876 = vadd.s32 %v810, %v827
    %v877 = vadd.s32 %v811, %v827
    %v878 = vadd.s32 %v812, %v827
    %v879 = vadd.s32 %v813, %v827
    %v880 = vadd.s32 %v814, %v827
    %v881 = vadd.s32 %v815, %v827
    %v882 = vadd.s32 %v816, %v827
    %v883 = vadd.s32 %v817, %v827
    %v884 = vadd.s32 %v818, %v827
    %v885 = vadd.s32 %v819, %v827
    %v886 = vadd.s32 %v820, %v827
    %v887 = vadd.s32 %v821, %v827
    %v888 = vadd.s32 %v822, %v827
    %v889 = vadd.s32 %v823, %v827
    %v890 = vadd.s32 %v824, %v827
    %v891 = vadd.s32 %v825, %v827
    %vm892 = vcmp.lt.s32.totalorder %v828, 500
    %vm893 = vcmp.lt.s32.totalorder %v829, 500
    %vm894 = vcmp.lt.s32.totalorder %v830, 500
    %vm895 = vcmp.lt.s32.totalorder %v831, 500
    %vm896 = vcmp.lt.s32.totalorder %v832, 500
    %vm897 = vcmp.lt.s32.totalorder %v833, 500
    %vm898 = vcmp.lt.s32.totalorder %v834, 500
    %vm899 = vcmp.lt.s32.totalorder %v835, 500
    %vm900 = vcmp.lt.s32.totalorder %v836, 500
    %vm901 = vcmp.lt.s32.totalorder %v837, 500
    %vm902 = vcmp.lt.s32.totalorder %v838, 500
    %vm903 = vcmp.lt.s32.totalorder %v839, 500
    %vm904 = vcmp.lt.s32.totalorder %v840, 500
    %vm905 = vcmp.lt.s32.totalorder %v841, 500
    %vm906 = vcmp.lt.s32.totalorder %v842, 500
    %vm907 = vcmp.lt.s32.totalorder %v843, 500
    %vm908 = vcmp.lt.s32.totalorder %v844, 500
    %vm909 = vcmp.lt.s32.totalorder %v845, 500
    %vm910 = vcmp.lt.s32.totalorder %v846, 500
    %vm911 = vcmp.lt.s32.totalorder %v847, 500
    %vm912 = vcmp.lt.s32.totalorder %v848, 500
    %vm913 = vcmp.lt.s32.totalorder %v849, 500
    %vm914 = vcmp.lt.s32.totalorder %v850, 500
    %vm915 = vcmp.lt.s32.totalorder %v851, 500
    %vm916 = vcmp.lt.s32.totalorder %v852, 500
    %vm917 = vcmp.lt.s32.totalorder %v853, 500
    %vm918 = vcmp.lt.s32.totalorder %v854, 500
    %vm919 = vcmp.lt.s32.totalorder %v855, 500
    %vm920 = vcmp.lt.s32.totalorder %v856, 500
    %vm921 = vcmp.lt.s32.totalorder %v857, 500
    %vm922 = vcmp.lt.s32.totalorder %v858, 500
    %vm923 = vcmp.lt.s32.totalorder %v859, 500
    %vm924 = vcmp.lt.s32.totalorder %v860, 500
    %vm925 = vcmp.lt.s32.totalorder %v861, 500
    %vm926 = vcmp.lt.s32.totalorder %v862, 500
    %vm927 = vcmp.lt.s32.totalorder %v863, 500
    %vm928 = vcmp.lt.s32.totalorder %v864, 500
    %vm929 = vcmp.lt.s32.totalorder %v865, 500
    %vm930 = vcmp.lt.s32.totalorder %v866, 500
    %vm931 = vcmp.lt.s32.totalorder %v867, 500
    %vm932 = vcmp.lt.s32.totalorder %v868, 500
    %vm933 = vcmp.lt.s32.totalorder %v869, 500
    %vm934 = vcmp.lt.s32.totalorder %v870, 500
    %vm935 = vcmp.lt.s32.totalorder %v871, 500
    %vm936 = vcmp.lt.s32.totalorder %v872, 500
    %vm937 = vcmp.lt.s32.totalorder %v873, 500
    %vm938 = vcmp.lt.s32.totalorder %v874, 500
    %vm939 = vcmp.lt.s32.totalorder %v875, 500
    %vm940 = vcmp.lt.s32.totalorder %v876, 500
    %vm941 = vcmp.lt.s32.totalorder %v877, 500
    %vm942 = vcmp.lt.s32.totalorder %v878, 500
    %vm943 = vcmp.lt.s32.totalorder %v879, 500
    %vm944 = vcmp.lt.s32.totalorder %v880, 500
    %vm945 = vcmp.lt.s32.totalorder %v881, 500
    %vm946 = vcmp.lt.s32.totalorder %v882, 500
    %vm947 = vcmp.lt.s32.totalorder %v883, 500
    %vm948 = vcmp.lt.s32.totalorder %v884, 500
    %vm949 = vcmp.lt.s32.totalorder %v885, 500
    %vm950 = vcmp.lt.s32.totalorder %v886, 500
    %vm951 = vcmp.lt.s32.totalorder %v887, 500
    %vm952 = vcmp.lt.s32.totalorder %v888, 500
    %vm953 = vcmp.lt.s32.totalorder %v889, 500
    %vm954 = vcmp.lt.s32.totalorder %v890, 500
    %vm955 = vcmp.lt.s32.totalorder %v891, 500
    %v956 = vsel %vm892, 1, 0
    %v957 = vsel %vm893, 1, 0
    %v958 = vsel %vm894, 1, 0
    %v959 = vsel %vm895, 1, 0
    %v960 = vsel %vm896, 1, 0
    %v961 = vsel %vm897, 1, 0
    %v962 = vsel %vm898, 1, 0
    %v963 = vsel %vm899, 1, 0
    %v964 = vsel %vm900, 1, 0
    %v965 = vsel %vm901, 1, 0
    %v966 = vsel %vm902, 1, 0
    %v967 = vsel %vm903, 1, 0
    %v968 = vsel %vm904, 1, 0
    %v969 = vsel %vm905, 1, 0
    %v970 = vsel %vm906, 1, 0
    %v971 = vsel %vm907, 1, 0
    %v972 = vsel %vm908, 1, 0
    %v973 = vsel %vm909, 1, 0
    %v974 = vsel %vm910, 1, 0
    %v975 = vsel %vm911, 1, 0
    %v976 = vsel %vm912, 1, 0
    %v977 = vsel %vm913, 1, 0
    %v978 = vsel %vm914, 1, 0
    %v979 = vsel %vm915, 1, 0
    %v980 = vsel %vm916, 1, 0
    %v981 = vsel %vm917, 1, 0
    %v982 = vsel %vm918, 1, 0
    %v983 = vsel %vm919, 1, 0
    %v984 = vsel %vm920, 1, 0
    %v985 = vsel %vm921, 1, 0
    %v986 = vsel %vm922, 1, 0
    %v987 = vsel %vm923, 1, 0
    %v988 = vsel %vm924, 1, 0
    %v989 = vsel %vm925, 1, 0
    %v990 = vsel %vm926, 1, 0
    %v991 = vsel %vm927, 1, 0
    %v992 = vsel %vm928, 1, 0
    %v993 = vsel %vm929, 1, 0
    %v994 = vsel %vm930, 1, 0
    %v995 = vsel %vm931, 1, 0
    %v996 = vsel %vm932, 1, 0
    %v997 = vsel %vm933, 1, 0
    %v998 = vsel %vm934, 1, 0
    %v999 = vsel %vm935, 1, 0
    %v1000 = vsel %vm936, 1, 0
    %v1001 = vsel %vm937, 1, 0
    %v1002 = vsel %vm938, 1, 0
    %v1003 = vsel %vm939, 1, 0
    %v1004 = vsel %vm940, 1, 0
    %v1005 = vsel %vm941, 1, 0
    %v1006 = vsel %vm942, 1, 0
    %v1007 = vsel %vm943, 1, 0
    %v1008 = vsel %vm944, 1, 0
    %v1009 = vsel %vm945, 1, 0
    %v1010 = vsel %vm946, 1, 0
    %v1011 = vsel %vm947, 1, 0
    %v1012 = vsel %vm948, 1, 0
    %v1013 = vsel %vm949, 1, 0
    %v1014 = vsel %vm950, 1, 0
    %v1015 = vsel %vm951, 1, 0
    %v1016 = vsel %vm952, 1, 0
    %v1017 = vsel %vm953, 1, 0
    %v1018 = vsel %vm954, 1, 0
    %v1019 = vsel %vm955, 1, 0
    %vm1020 = vcmp.eq.s32.totalorder %v956, 1
    %vm1021 = vcmp.eq.s32.totalorder %v957, 1
    %vm1022 = vcmp.eq.s32.totalorder %v958, 1
    %vm1023 = vcmp.eq.s32.totalorder %v959, 1
    %vm1024 = vcmp.eq.s32.totalorder %v960, 1
    %vm1025 = vcmp.eq.s32.totalorder %v961, 1
    %vm1026 = vcmp.eq.s32.totalorder %v962, 1
    %vm1027 = vcmp.eq.s32.totalorder %v963, 1
    %vm1028 = vcmp.eq.s32.totalorder %v964, 1
    %vm1029 = vcmp.eq.s32.totalorder %v965, 1
    %vm1030 = vcmp.eq.s32.totalorder %v966, 1
    %vm1031 = vcmp.eq.s32.totalorder %v967, 1
    %vm1032 = vcmp.eq.s32.totalorder %v968, 1
    %vm1033 = vcmp.eq.s32.totalorder %v969, 1
    %vm1034 = vcmp.eq.s32.totalorder %v970, 1
    %vm1035 = vcmp.eq.s32.totalorder %v971, 1
    %vm1036 = vcmp.eq.s32.totalorder %v972, 1
    %vm1037 = vcmp.eq.s32.totalorder %v973, 1
    %vm1038 = vcmp.eq.s32.totalorder %v974, 1
    %vm1039 = vcmp.eq.s32.totalorder %v975, 1
    %vm1040 = vcmp.eq.s32.totalorder %v976, 1
    %vm1041 = vcmp.eq.s32.totalorder %v977, 1
    %vm1042 = vcmp.eq.s32.totalorder %v978, 1
    %vm1043 = vcmp.eq.s32.totalorder %v979, 1
    %vm1044 = vcmp.eq.s32.totalorder %v980, 1
    %vm1045 = vcmp.eq.s32.totalorder %v981, 1
    %vm1046 = vcmp.eq.s32.totalorder %v982, 1
    %vm1047 = vcmp.eq.s32.totalorder %v983, 1
    %vm1048 = vcmp.eq.s32.totalorder %v984, 1
    %vm1049 = vcmp.eq.s32.totalorder %v985, 1
    %vm1050 = vcmp.eq.s32.totalorder %v986, 1
    %vm1051 = vcmp.eq.s32.totalorder %v987, 1
    %vm1052 = vcmp.eq.s32.totalorder %v988, 1
    %vm1053 = vcmp.eq.s32.totalorder %v989, 1
    %vm1054 = vcmp.eq.s32.totalorder %v990, 1
    %vm1055 = vcmp.eq.s32.totalorder %v991, 1
    %vm1056 = vcmp.eq.s32.totalorder %v992, 1
    %vm1057 = vcmp.eq.s32.totalorder %v993, 1
    %vm1058 = vcmp.eq.s32.totalorder %v994, 1
    %vm1059 = vcmp.eq.s32.totalorder %v995, 1
    %vm1060 = vcmp.eq.s32.totalorder %v996, 1
    %vm1061 = vcmp.eq.s32.totalorder %v997, 1
    %vm1062 = vcmp.eq.s32.totalorder %v998, 1
    %vm1063 = vcmp.eq.s32.totalorder %v999, 1
    %vm1064 = vcmp.eq.s32.totalorder %v1000, 1
    %vm1065 = vcmp.eq.s32.totalorder %v1001, 1
    %vm1066 = vcmp.eq.s32.totalorder %v1002, 1
    %vm1067 = vcmp.eq.s32.totalorder %v1003, 1
    %vm1068 = vcmp.eq.s32.totalorder %v1004, 1
    %vm1069 = vcmp.eq.s32.totalorder %v1005, 1
    %vm1070 = vcmp.eq.s32.totalorder %v1006, 1
    %vm1071 = vcmp.eq.s32.totalorder %v1007, 1
    %vm1072 = vcmp.eq.s32.totalorder %v1008, 1
    %vm1073 = vcmp.eq.s32.totalorder %v1009, 1
    %vm1074 = vcmp.eq.s32.totalorder %v1010, 1
    %vm1075 = vcmp.eq.s32.totalorder %v1011, 1
    %vm1076 = vcmp.eq.s32.totalorder %v1012, 1
    %vm1077 = vcmp.eq.s32.totalorder %v1013, 1
    %vm1078 = vcmp.eq.s32.totalorder %v1014, 1
    %vm1079 = vcmp.eq.s32.totalorder %v1015, 1
    %vm1080 = vcmp.eq.s32.totalorder %v1016, 1
    %vm1081 = vcmp.eq.s32.totalorder %v1017, 1
    %vm1082 = vcmp.eq.s32.totalorder %v1018, 1
    %vm1083 = vcmp.eq.s32.totalorder %v1019, 1
    %v1084 = vsel %vm1020, %v442, -inf
    %v1085 = vsel %vm1020, %v444, -inf
    %v1086 = vsel %vm1021, %v446, -inf
    %v1087 = vsel %vm1021, %v448, -inf
    %v1088 = vsel %vm1022, %v452, -inf
    %v1089 = vsel %vm1022, %v454, -inf
    %v1090 = vsel %vm1023, %v456, -inf
    %v1091 = vsel %vm1023, %v458, -inf
    %v1092 = vsel %vm1024, %v462, -inf
    %v1093 = vsel %vm1024, %v464, -inf
    %v1094 = vsel %vm1025, %v466, -inf
    %v1095 = vsel %vm1025, %v468, -inf
    %v1096 = vsel %vm1026, %v472, -inf
    %v1097 = vsel %vm1026, %v474, -inf
    %v1098 = vsel %vm1027, %v476, -inf
    %v1099 = vsel %vm1027, %v478, -inf
    %v1100 = vsel %vm1028, %v482, -inf
    %v1101 = vsel %vm1028, %v484, -inf
    %v1102 = vsel %vm1029, %v486, -inf
    %v1103 = vsel %vm1029, %v488, -inf
    %v1104 = vsel %vm1030, %v492, -inf
    %v1105 = vsel %vm1030, %v494, -inf
    %v1106 = vsel %vm1031, %v496, -inf
    %v1107 = vsel %vm1031, %v498, -inf
    %v1108 = vsel %vm1032, %v502, -inf
    %v1109 = vsel %vm1032, %v504, -inf
    %v1110 = vsel %vm1033, %v506, -inf
    %v1111 = vsel %vm1033, %v508, -inf
    %v1112 = vsel %vm1034, %v512, -inf
    %v1113 = vsel %vm1034, %v514, -inf
    %v1114 = vsel %vm1035, %v516, -inf
    %v1115 = vsel %vm1035, %v518, -inf
    %v1116 = vsel %vm1036, %v522, -inf
    %v1117 = vsel %vm1036, %v524, -inf
    %v1118 = vsel %vm1037, %v526, -inf
    %v1119 = vsel %vm1037, %v528, -inf
    %v1120 = vsel %vm1038, %v532, -inf
    %v1121 = vsel %vm1038, %v534, -inf
    %v1122 = vsel %vm1039, %v536, -inf
    %v1123 = vsel %vm1039, %v538, -inf
    %v1124 = vsel %vm1040, %v542, -inf
    %v1125 = vsel %vm1040, %v544, -inf
    %v1126 = vsel %vm1041, %v546, -inf
    %v1127 = vsel %vm1041, %v548, -inf
    %v1128 = vsel %vm1042, %v552, -inf
    %v1129 = vsel %vm1042, %v554, -inf
    %v1130 = vsel %vm1043, %v556, -inf
    %v1131 = vsel %vm1043, %v558, -inf
    %v1132 = vsel %vm1044, %v562, -inf
    %v1133 = vsel %vm1044, %v564, -inf
    %v1134 = vsel %vm1045, %v566, -inf
    %v1135 = vsel %vm1045, %v568, -inf
    %v1136 = vsel %vm1046, %v572, -inf
    %v1137 = vsel %vm1046, %v574, -inf
    %v1138 = vsel %vm1047, %v576, -inf
    %v1139 = vsel %vm1047, %v578, -inf
    %v1140 = vsel %vm1048, %v582, -inf
    %v1141 = vsel %vm1048, %v584, -inf
    %v1142 = vsel %vm1049, %v586, -inf
    %v1143 = vsel %vm1049, %v588, -inf
    %v1144 = vsel %vm1050, %v592, -inf
    %v1145 = vsel %vm1050, %v594, -inf
    %v1146 = vsel %vm1051, %v596, -inf
    %v1147 = vsel %vm1051, %v598, -inf
    %v1148 = vsel %vm1052, %v602, -inf
    %v1149 = vsel %vm1052, %v604, -inf
    %v1150 = vsel %vm1053, %v606, -inf
    %v1151 = vsel %vm1053, %v608, -inf
    %v1152 = vsel %vm1054, %v612, -inf
    %v1153 = vsel %vm1054, %v614, -inf
    %v1154 = vsel %vm1055, %v616, -inf
    %v1155 = vsel %vm1055, %v618, -inf
    %v1156 = vsel %vm1056, %v622, -inf
    %v1157 = vsel %vm1056, %v624, -inf
    %v1158 = vsel %vm1057, %v626, -inf
    %v1159 = vsel %vm1057, %v628, -inf
    %v1160 = vsel %vm1058, %v632, -inf
    %v1161 = vsel %vm1058, %v634, -inf
    %v1162 = vsel %vm1059, %v636, -inf
    %v1163 = vsel %vm1059, %v638, -inf
    %v1164 = vsel %vm1060, %v642, -inf
    %v1165 = vsel %vm1060, %v644, -inf
    %v1166 = vsel %vm1061, %v646, -inf
    %v1167 = vsel %vm1061, %v648, -inf
    %v1168 = vsel %vm1062, %v652, -inf
    %v1169 = vsel %vm1062, %v654, -inf
    %v1170 = vsel %vm1063, %v656, -inf
    %v1171 = vsel %vm1063, %v658, -inf
    %v1172 = vsel %vm1064, %v662, -inf
    %v1173 = vsel %vm1064, %v664, -inf
    %v1174 = vsel %vm1065, %v666, -inf
    %v1175 = vsel %vm1065, %v668, -inf
    %v1176 = vsel %vm1066, %v672, -inf
    %v1177 = vsel %vm1066, %v674, -inf
    %v1178 = vsel %vm1067, %v676, -inf
    %v1179 = vsel %vm1067, %v678, -inf
    %v1180 = vsel %vm1068, %v682, -inf
    %v1181 = vsel %vm1068, %v684, -inf
    %v1182 = vsel %vm1069, %v686, -inf
    %v1183 = vsel %vm1069, %v688, -inf
    %v1184 = vsel %vm1070, %v692, -inf
    %v1185 = vsel %vm1070, %v694, -inf
    %v1186 = vsel %vm1071, %v696, -inf
    %v1187 = vsel %vm1071, %v698, -inf
    %v1188 = vsel %vm1072, %v702, -inf
    %v1189 = vsel %vm1072, %v704, -inf
    %v1190 = vsel %vm1073, %v706, -inf
    %v1191 = vsel %vm1073, %v708, -inf
    %v1192 = vsel %vm1074, %v712, -inf
    %v1193 = vsel %vm1074, %v714, -inf
    %v1194 = vsel %vm1075, %v716, -inf
    %v1195 = vsel %vm1075, %v718, -inf
    %v1196 = vsel %vm1076, %v722, -inf
    %v1197 = vsel %vm1076, %v724, -inf
    %v1198 = vsel %vm1077, %v726, -inf
    %v1199 = vsel %vm1077, %v728, -inf
    %v1200 = vsel %vm1078, %v732, -inf
    %v1201 = vsel %vm1078, %v734, -inf
    %v1202 = vsel %vm1079, %v736, -inf
    %v1203 = vsel %vm1079, %v738, -inf
    %v1204 = vsel %vm1080, %v742, -inf
    %v1205 = vsel %vm1080, %v744, -inf
    %v1206 = vsel %vm1081, %v746, -inf
    %v1207 = vsel %vm1081, %v748, -inf
    %v1208 = vsel %vm1082, %v752, -inf
    %v1209 = vsel %vm1082, %v754, -inf
    %v1210 = vsel %vm1083, %v756, -inf
    %v1211 = vsel %vm1083, %v758, -inf
    %v1212 = vsub.s32 %v760, %v827
    %v1213 = vld [vmem:[#allocation4] sm:$0x3]
    %v1214 = vlaneseq
    %v1215 = vshrl.u32 %v1214, 7
    %v1216 = vsub.s32 0, %v1215
    %v1217 = vrot.slane %v1212, %v1216
    %v1218 = vlaneseq
    %v1219 = vshrl.u32 %v1218, 7
    %v1220 = vsub.s32 1, %v1219
    %v1221 = vrot.slane %v1212, %v1220
    %vm1222 = vcmp.eq.s32.totalorder %v762, %v1217
    %vm1223 = vcmp.eq.s32.totalorder %v762, %v1221
    %vm1224 = vcmp.eq.s32.totalorder %v763, %v1217
    %vm1225 = vcmp.eq.s32.totalorder %v763, %v1221
    %vm1226 = vcmp.eq.s32.totalorder %v764, %v1217
    %vm1227 = vcmp.eq.s32.totalorder %v764, %v1221
    %vm1228 = vcmp.eq.s32.totalorder %v765, %v1217
    %vm1229 = vcmp.eq.s32.totalorder %v765, %v1221
    %vm1230 = vcmp.eq.s32.totalorder %v766, %v1217
    %vm1231 = vcmp.eq.s32.totalorder %v766, %v1221
    %vm1232 = vcmp.eq.s32.totalorder %v767, %v1217
    %vm1233 = vcmp.eq.s32.totalorder %v767, %v1221
    %vm1234 = vcmp.eq.s32.totalorder %v768, %v1217
    %vm1235 = vcmp.eq.s32.totalorder %v768, %v1221
    %vm1236 = vcmp.eq.s32.totalorder %v769, %v1217
    %vm1237 = vcmp.eq.s32.totalorder %v769, %v1221
    %vm1238 = vcmp.eq.s32.totalorder %v770, %v1217
    %vm1239 = vcmp.eq.s32.totalorder %v770, %v1221
    %vm1240 = vcmp.eq.s32.totalorder %v771, %v1217
    %vm1241 = vcmp.eq.s32.totalorder %v771, %v1221
    %vm1242 = vcmp.eq.s32.totalorder %v772, %v1217
    %vm1243 = vcmp.eq.s32.totalorder %v772, %v1221
    %vm1244 = vcmp.eq.s32.totalorder %v773, %v1217
    %vm1245 = vcmp.eq.s32.totalorder %v773, %v1221
    %vm1246 = vcmp.eq.s32.totalorder %v774, %v1217
    %vm1247 = vcmp.eq.s32.totalorder %v774, %v1221
    %vm1248 = vcmp.eq.s32.totalorder %v775, %v1217
    %vm1249 = vcmp.eq.s32.totalorder %v775, %v1221
    %vm1250 = vcmp.eq.s32.totalorder %v776, %v1217
    %vm1251 = vcmp.eq.s32.totalorder %v776, %v1221
    %vm1252 = vcmp.eq.s32.totalorder %v777, %v1217
    %vm1253 = vcmp.eq.s32.totalorder %v777, %v1221
    %vm1254 = vcmp.eq.s32.totalorder %v778, %v1217
    %vm1255 = vcmp.eq.s32.totalorder %v778, %v1221
    %vm1256 = vcmp.eq.s32.totalorder %v779, %v1217
    %vm1257 = vcmp.eq.s32.totalorder %v779, %v1221
    %vm1258 = vcmp.eq.s32.totalorder %v780, %v1217
    %vm1259 = vcmp.eq.s32.totalorder %v780, %v1221
    %vm1260 = vcmp.eq.s32.totalorder %v781, %v1217
    %vm1261 = vcmp.eq.s32.totalorder %v781, %v1221
    %vm1262 = vcmp.eq.s32.totalorder %v782, %v1217
    %vm1263 = vcmp.eq.s32.totalorder %v782, %v1221
    %vm1264 = vcmp.eq.s32.totalorder %v783, %v1217
    %vm1265 = vcmp.eq.s32.totalorder %v783, %v1221
    %vm1266 = vcmp.eq.s32.totalorder %v784, %v1217
    %vm1267 = vcmp.eq.s32.totalorder %v784, %v1221
    %vm1268 = vcmp.eq.s32.totalorder %v785, %v1217
    %vm1269 = vcmp.eq.s32.totalorder %v785, %v1221
    %vm1270 = vcmp.eq.s32.totalorder %v786, %v1217
    %vm1271 = vcmp.eq.s32.totalorder %v786, %v1221
    %vm1272 = vcmp.eq.s32.totalorder %v787, %v1217
    %vm1273 = vcmp.eq.s32.totalorder %v787, %v1221
    %vm1274 = vcmp.eq.s32.totalorder %v788, %v1217
    %vm1275 = vcmp.eq.s32.totalorder %v788, %v1221
    %vm1276 = vcmp.eq.s32.totalorder %v789, %v1217
    %vm1277 = vcmp.eq.s32.totalorder %v789, %v1221
    %vm1278 = vcmp.eq.s32.totalorder %v790, %v1217
    %vm1279 = vcmp.eq.s32.totalorder %v790, %v1221
    %vm1280 = vcmp.eq.s32.totalorder %v791, %v1217
    %vm1281 = vcmp.eq.s32.totalorder %v791, %v1221
    %vm1282 = vcmp.eq.s32.totalorder %v792, %v1217
    %vm1283 = vcmp.eq.s32.totalorder %v792, %v1221
    %vm1284 = vcmp.eq.s32.totalorder %v793, %v1217
    %vm1285 = vcmp.eq.s32.totalorder %v793, %v1221
    %vm1286 = vcmp.eq.s32.totalorder %v794, %v1217
    %vm1287 = vcmp.eq.s32.totalorder %v794, %v1221
    %vm1288 = vcmp.eq.s32.totalorder %v795, %v1217
    %vm1289 = vcmp.eq.s32.totalorder %v795, %v1221
    %vm1290 = vcmp.eq.s32.totalorder %v796, %v1217
    %vm1291 = vcmp.eq.s32.totalorder %v796, %v1221
    %vm1292 = vcmp.eq.s32.totalorder %v797, %v1217
    %vm1293 = vcmp.eq.s32.totalorder %v797, %v1221
    %vm1294 = vcmp.eq.s32.totalorder %v798, %v1217
    %vm1295 = vcmp.eq.s32.totalorder %v798, %v1221
    %vm1296 = vcmp.eq.s32.totalorder %v799, %v1217
    %vm1297 = vcmp.eq.s32.totalorder %v799, %v1221
    %vm1298 = vcmp.eq.s32.totalorder %v800, %v1217
    %vm1299 = vcmp.eq.s32.totalorder %v800, %v1221
    %vm1300 = vcmp.eq.s32.totalorder %v801, %v1217
    %vm1301 = vcmp.eq.s32.totalorder %v801, %v1221
    %vm1302 = vcmp.eq.s32.totalorder %v802, %v1217
    %vm1303 = vcmp.eq.s32.totalorder %v802, %v1221
    %vm1304 = vcmp.eq.s32.totalorder %v803, %v1217
    %vm1305 = vcmp.eq.s32.totalorder %v803, %v1221
    %vm1306 = vcmp.eq.s32.totalorder %v804, %v1217
    %vm1307 = vcmp.eq.s32.totalorder %v804, %v1221
    %vm1308 = vcmp.eq.s32.totalorder %v805, %v1217
    %vm1309 = vcmp.eq.s32.totalorder %v805, %v1221
    %vm1310 = vcmp.eq.s32.totalorder %v806, %v1217
    %vm1311 = vcmp.eq.s32.totalorder %v806, %v1221
    %vm1312 = vcmp.eq.s32.totalorder %v807, %v1217
    %vm1313 = vcmp.eq.s32.totalorder %v807, %v1221
    %vm1314 = vcmp.eq.s32.totalorder %v808, %v1217
    %vm1315 = vcmp.eq.s32.totalorder %v808, %v1221
    %vm1316 = vcmp.eq.s32.totalorder %v809, %v1217
    %vm1317 = vcmp.eq.s32.totalorder %v809, %v1221
    %vm1318 = vcmp.eq.s32.totalorder %v810, %v1217
    %vm1319 = vcmp.eq.s32.totalorder %v810, %v1221
    %vm1320 = vcmp.eq.s32.totalorder %v811, %v1217
    %vm1321 = vcmp.eq.s32.totalorder %v811, %v1221
    %vm1322 = vcmp.eq.s32.totalorder %v812, %v1217
    %vm1323 = vcmp.eq.s32.totalorder %v812, %v1221
    %vm1324 = vcmp.eq.s32.totalorder %v813, %v1217
    %vm1325 = vcmp.eq.s32.totalorder %v813, %v1221
    %vm1326 = vcmp.eq.s32.totalorder %v814, %v1217
    %vm1327 = vcmp.eq.s32.totalorder %v814, %v1221
    %vm1328 = vcmp.eq.s32.totalorder %v815, %v1217
    %vm1329 = vcmp.eq.s32.totalorder %v815, %v1221
    %vm1330 = vcmp.eq.s32.totalorder %v816, %v1217
    %vm1331 = vcmp.eq.s32.totalorder %v816, %v1221
    %vm1332 = vcmp.eq.s32.totalorder %v817, %v1217
    %vm1333 = vcmp.eq.s32.totalorder %v817, %v1221
    %vm1334 = vcmp.eq.s32.totalorder %v818, %v1217
    %vm1335 = vcmp.eq.s32.totalorder %v818, %v1221
    %vm1336 = vcmp.eq.s32.totalorder %v819, %v1217
    %vm1337 = vcmp.eq.s32.totalorder %v819, %v1221
    %vm1338 = vcmp.eq.s32.totalorder %v820, %v1217
    %vm1339 = vcmp.eq.s32.totalorder %v820, %v1221
    %vm1340 = vcmp.eq.s32.totalorder %v821, %v1217
    %vm1341 = vcmp.eq.s32.totalorder %v821, %v1221
    %vm1342 = vcmp.eq.s32.totalorder %v822, %v1217
    %vm1343 = vcmp.eq.s32.totalorder %v822, %v1221
    %vm1344 = vcmp.eq.s32.totalorder %v823, %v1217
    %vm1345 = vcmp.eq.s32.totalorder %v823, %v1221
    %vm1346 = vcmp.eq.s32.totalorder %v824, %v1217
    %vm1347 = vcmp.eq.s32.totalorder %v824, %v1221
    %vm1348 = vcmp.eq.s32.totalorder %v825, %v1217
    %vm1349 = vcmp.eq.s32.totalorder %v825, %v1221
    %v1350 = vsel %vm1222, %v1084, 0.0
    %v1351 = vsel %vm1223, %v1085, 0.0
    %v1352 = vsel %vm1224, %v1086, 0.0
    %v1353 = vsel %vm1225, %v1087, 0.0
    %v1354 = vsel %vm1226, %v1088, 0.0
    %v1355 = vsel %vm1227, %v1089, 0.0
    %v1356 = vsel %vm1228, %v1090, 0.0
    %v1357 = vsel %vm1229, %v1091, 0.0
    %v1358 = vsel %vm1230, %v1092, 0.0
    %v1359 = vsel %vm1231, %v1093, 0.0
    %v1360 = vsel %vm1232, %v1094, 0.0
    %v1361 = vsel %vm1233, %v1095, 0.0
    %v1362 = vsel %vm1234, %v1096, 0.0
    %v1363 = vsel %vm1235, %v1097, 0.0
    %v1364 = vsel %vm1236, %v1098, 0.0
    %v1365 = vsel %vm1237, %v1099, 0.0
    %v1366 = vsel %vm1238, %v1100, 0.0
    %v1367 = vsel %vm1239, %v1101, 0.0
    %v1368 = vsel %vm1240, %v1102, 0.0
    %v1369 = vsel %vm1241, %v1103, 0.0
    %v1370 = vsel %vm1242, %v1104, 0.0
    %v1371 = vsel %vm1243, %v1105, 0.0
    %v1372 = vsel %vm1244, %v1106, 0.0
    %v1373 = vsel %vm1245, %v1107, 0.0
    %v1374 = vsel %vm1246, %v1108, 0.0
    %v1375 = vsel %vm1247, %v1109, 0.0
    %v1376 = vsel %vm1248, %v1110, 0.0
    %v1377 = vsel %vm1249, %v1111, 0.0
    %v1378 = vsel %vm1250, %v1112, 0.0
    %v1379 = vsel %vm1251, %v1113, 0.0
    %v1380 = vsel %vm1252, %v1114, 0.0
    %v1381 = vsel %vm1253, %v1115, 0.0
    %v1382 = vsel %vm1254, %v1116, 0.0
    %v1383 = vsel %vm1255, %v1117, 0.0
    %v1384 = vsel %vm1256, %v1118, 0.0
    %v1385 = vsel %vm1257, %v1119, 0.0
    %v1386 = vsel %vm1258, %v1120, 0.0
    %v1387 = vsel %vm1259, %v1121, 0.0
    %v1388 = vsel %vm1260, %v1122, 0.0
    %v1389 = vsel %vm1261, %v1123, 0.0
    %v1390 = vsel %vm1262, %v1124, 0.0
    %v1391 = vsel %vm1263, %v1125, 0.0
    %v1392 = vsel %vm1264, %v1126, 0.0
    %v1393 = vsel %vm1265, %v1127, 0.0
    %v1394 = vsel %vm1266, %v1128, 0.0
    %v1395 = vsel %vm1267, %v1129, 0.0
    %v1396 = vsel %vm1268, %v1130, 0.0
    %v1397 = vsel %vm1269, %v1131, 0.0
    %v1398 = vsel %vm1270, %v1132, 0.0
    %v1399 = vsel %vm1271, %v1133, 0.0
    %v1400 = vsel %vm1272, %v1134, 0.0
    %v1401 = vsel %vm1273, %v1135, 0.0
    %v1402 = vsel %vm1274, %v1136, 0.0
    %v1403 = vsel %vm1275, %v1137, 0.0
    %v1404 = vsel %vm1276, %v1138, 0.0
    %v1405 = vsel %vm1277, %v1139, 0.0
    %v1406 = vsel %vm1278, %v1140, 0.0
    %v1407 = vsel %vm1279, %v1141, 0.0
    %v1408 = vsel %vm1280, %v1142, 0.0
    %v1409 = vsel %vm1281, %v1143, 0.0
    %v1410 = vsel %vm1282, %v1144, 0.0
    %v1411 = vsel %vm1283, %v1145, 0.0
    %v1412 = vsel %vm1284, %v1146, 0.0
    %v1413 = vsel %vm1285, %v1147, 0.0
    %v1414 = vsel %vm1286, %v1148, 0.0
    %v1415 = vsel %vm1287, %v1149, 0.0
    %v1416 = vsel %vm1288, %v1150, 0.0
    %v1417 = vsel %vm1289, %v1151, 0.0
    %v1418 = vsel %vm1290, %v1152, 0.0
    %v1419 = vsel %vm1291, %v1153, 0.0
    %v1420 = vsel %vm1292, %v1154, 0.0
    %v1421 = vsel %vm1293, %v1155, 0.0
    %v1422 = vsel %vm1294, %v1156, 0.0
    %v1423 = vsel %vm1295, %v1157, 0.0
    %v1424 = vsel %vm1296, %v1158, 0.0
    %v1425 = vsel %vm1297, %v1159, 0.0
    %v1426 = vsel %vm1298, %v1160, 0.0
    %v1427 = vsel %vm1299, %v1161, 0.0
    %v1428 = vsel %vm1300, %v1162, 0.0
    %v1429 = vsel %vm1301, %v1163, 0.0
    %v1430 = vsel %vm1302, %v1164, 0.0
    %v1431 = vsel %vm1303, %v1165, 0.0
    %v1432 = vsel %vm1304, %v1166, 0.0
    %v1433 = vsel %vm1305, %v1167, 0.0
    %v1434 = vsel %vm1306, %v1168, 0.0
    %v1435 = vsel %vm1307, %v1169, 0.0
    %v1436 = vsel %vm1308, %v1170, 0.0
    %v1437 = vsel %vm1309, %v1171, 0.0
    %v1438 = vsel %vm1310, %v1172, 0.0
    %v1439 = vsel %vm1311, %v1173, 0.0
    %v1440 = vsel %vm1312, %v1174, 0.0
    %v1441 = vsel %vm1313, %v1175, 0.0
    %v1442 = vsel %vm1314, %v1176, 0.0
    %v1443 = vsel %vm1315, %v1177, 0.0
    %v1444 = vsel %vm1316, %v1178, 0.0
    %v1445 = vsel %vm1317, %v1179, 0.0
    %v1446 = vsel %vm1318, %v1180, 0.0
    %v1447 = vsel %vm1319, %v1181, 0.0
    %v1448 = vsel %vm1320, %v1182, 0.0
    %v1449 = vsel %vm1321, %v1183, 0.0
    %v1450 = vsel %vm1322, %v1184, 0.0
    %v1451 = vsel %vm1323, %v1185, 0.0
    %v1452 = vsel %vm1324, %v1186, 0.0
    %v1453 = vsel %vm1325, %v1187, 0.0
    %v1454 = vsel %vm1326, %v1188, 0.0
    %v1455 = vsel %vm1327, %v1189, 0.0
    %v1456 = vsel %vm1328, %v1190, 0.0
    %v1457 = vsel %vm1329, %v1191, 0.0
    %v1458 = vsel %vm1330, %v1192, 0.0
    %v1459 = vsel %vm1331, %v1193, 0.0
    %v1460 = vsel %vm1332, %v1194, 0.0
    %v1461 = vsel %vm1333, %v1195, 0.0
    %v1462 = vsel %vm1334, %v1196, 0.0
    %v1463 = vsel %vm1335, %v1197, 0.0
    %v1464 = vsel %vm1336, %v1198, 0.0
    %v1465 = vsel %vm1337, %v1199, 0.0
    %v1466 = vsel %vm1338, %v1200, 0.0
    %v1467 = vsel %vm1339, %v1201, 0.0
    %v1468 = vsel %vm1340, %v1202, 0.0
    %v1469 = vsel %vm1341, %v1203, 0.0
    %v1470 = vsel %vm1342, %v1204, 0.0
    %v1471 = vsel %vm1343, %v1205, 0.0
    %v1472 = vsel %vm1344, %v1206, 0.0
    %v1473 = vsel %vm1345, %v1207, 0.0
    %v1474 = vsel %vm1346, %v1208, 0.0
    %v1475 = vsel %vm1347, %v1209, 0.0
    %v1476 = vsel %vm1348, %v1210, 0.0
    %v1477 = vsel %vm1349, %v1211, 0.0
    %v1478 = vadd.f32 %v1350, %v1352
    %v1479 = vadd.f32 %v1478, %v1354
    %v1480 = vadd.f32 %v1479, %v1356
    %v1481 = vadd.f32 %v1480, %v1358
    %v1482 = vadd.f32 %v1481, %v1360
    %v1483 = vadd.f32 %v1482, %v1362
    %v1484 = vadd.f32 %v1483, %v1364
    %v1485 = vadd.f32 %v1484, %v1366
    %v1486 = vadd.f32 %v1485, %v1368
    %v1487 = vadd.f32 %v1486, %v1370
    %v1488 = vadd.f32 %v1487, %v1372
    %v1489 = vadd.f32 %v1488, %v1374
    %v1490 = vadd.f32 %v1489, %v1376
    %v1491 = vadd.f32 %v1490, %v1378
    %v1492 = vadd.f32 %v1491, %v1380
    %v1493 = vadd.f32 %v1492, %v1382
    %v1494 = vadd.f32 %v1493, %v1384
    %v1495 = vadd.f32 %v1494, %v1386
    %v1496 = vadd.f32 %v1495, %v1388
    %v1497 = vadd.f32 %v1496, %v1390
    %v1498 = vadd.f32 %v1497, %v1392
    %v1499 = vadd.f32 %v1498, %v1394
    %v1500 = vadd.f32 %v1499, %v1396
    %v1501 = vadd.f32 %v1500, %v1398
    %v1502 = vadd.f32 %v1501, %v1400
    %v1503 = vadd.f32 %v1502, %v1402
    %v1504 = vadd.f32 %v1503, %v1404
    %v1505 = vadd.f32 %v1504, %v1406
    %v1506 = vadd.f32 %v1505, %v1408
    %v1507 = vadd.f32 %v1506, %v1410
    %v1508 = vadd.f32 %v1507, %v1412
    %v1509 = vadd.f32 %v1508, %v1414
    %v1510 = vadd.f32 %v1509, %v1416
    %v1511 = vadd.f32 %v1510, %v1418
    %v1512 = vadd.f32 %v1511, %v1420
    %v1513 = vadd.f32 %v1512, %v1422
    %v1514 = vadd.f32 %v1513, %v1424
    %v1515 = vadd.f32 %v1514, %v1426
    %v1516 = vadd.f32 %v1515, %v1428
    %v1517 = vadd.f32 %v1516, %v1430
    %v1518 = vadd.f32 %v1517, %v1432
    %v1519 = vadd.f32 %v1518, %v1434
    %v1520 = vadd.f32 %v1519, %v1436
    %v1521 = vadd.f32 %v1520, %v1438
    %v1522 = vadd.f32 %v1521, %v1440
    %v1523 = vadd.f32 %v1522, %v1442
    %v1524 = vadd.f32 %v1523, %v1444
    %v1525 = vadd.f32 %v1524, %v1446
    %v1526 = vadd.f32 %v1525, %v1448
    %v1527 = vadd.f32 %v1526, %v1450
    %v1528 = vadd.f32 %v1527, %v1452
    %v1529 = vadd.f32 %v1528, %v1454
    %v1530 = vadd.f32 %v1529, %v1456
    %v1531 = vadd.f32 %v1530, %v1458
    %v1532 = vadd.f32 %v1531, %v1460
    %v1533 = vadd.f32 %v1532, %v1462
    %v1534 = vadd.f32 %v1533, %v1464
    %v1535 = vadd.f32 %v1534, %v1466
    %v1536 = vadd.f32 %v1535, %v1468
    %v1537 = vadd.f32 %v1536, %v1470
    %v1538 = vadd.f32 %v1537, %v1472
    %v1539 = vadd.f32 %v1538, %v1474
    %v1540 = vadd.f32 %v1539, %v1476
    %v1541 = vrot.slane %v1540, 4
    %v1542 = vadd.f32 %v1540, %v1541
    %v1543 = vrot.slane %v1542, 2
    %v1544 = vadd.f32 %v1542, %v1543
    %v1545 = vrot.slane %v1544, 1
    %v1546 = vadd.f32 %v1544, %v1545
    %v1547 = vadd.f32 %v1351, %v1353
    %v1548 = vadd.f32 %v1547, %v1355
    %v1549 = vadd.f32 %v1548, %v1357
    %v1550 = vadd.f32 %v1549, %v1359
    %v1551 = vadd.f32 %v1550, %v1361
    %v1552 = vadd.f32 %v1551, %v1363
    %v1553 = vadd.f32 %v1552, %v1365
    %v1554 = vadd.f32 %v1553, %v1367
    %v1555 = vadd.f32 %v1554, %v1369
    %v1556 = vadd.f32 %v1555, %v1371
    %v1557 = vadd.f32 %v1556, %v1373
    %v1558 = vadd.f32 %v1557, %v1375
    %v1559 = vadd.f32 %v1558, %v1377
    %v1560 = vadd.f32 %v1559, %v1379
    %v1561 = vadd.f32 %v1560, %v1381
    %v1562 = vadd.f32 %v1561, %v1383
    %v1563 = vadd.f32 %v1562, %v1385
    %v1564 = vadd.f32 %v1563, %v1387
    %v1565 = vadd.f32 %v1564, %v1389
    %v1566 = vadd.f32 %v1565, %v1391
    %v1567 = vadd.f32 %v1566, %v1393
    %v1568 = vadd.f32 %v1567, %v1395
    %v1569 = vadd.f32 %v1568, %v1397
    %v1570 = vadd.f32 %v1569, %v1399
    %v1571 = vadd.f32 %v1570, %v1401
    %v1572 = vadd.f32 %v1571, %v1403
    %v1573 = vadd.f32 %v1572, %v1405
    %v1574 = vadd.f32 %v1573, %v1407
    %v1575 = vadd.f32 %v1574, %v1409
    %v1576 = vadd.f32 %v1575, %v1411
    %v1577 = vadd.f32 %v1576, %v1413
    %v1578 = vadd.f32 %v1577, %v1415
    %v1579 = vadd.f32 %v1578, %v1417
    %v1580 = vadd.f32 %v1579, %v1419
    %v1581 = vadd.f32 %v1580, %v1421
    %v1582 = vadd.f32 %v1581, %v1423
    %v1583 = vadd.f32 %v1582, %v1425
    %v1584 = vadd.f32 %v1583, %v1427
    %v1585 = vadd.f32 %v1584, %v1429
    %v1586 = vadd.f32 %v1585, %v1431
    %v1587 = vadd.f32 %v1586, %v1433
    %v1588 = vadd.f32 %v1587, %v1435
    %v1589 = vadd.f32 %v1588, %v1437
    %v1590 = vadd.f32 %v1589, %v1439
    %v1591 = vadd.f32 %v1590, %v1441
    %v1592 = vadd.f32 %v1591, %v1443
    %v1593 = vadd.f32 %v1592, %v1445
    %v1594 = vadd.f32 %v1593, %v1447
    %v1595 = vadd.f32 %v1594, %v1449
    %v1596 = vadd.f32 %v1595, %v1451
    %v1597 = vadd.f32 %v1596, %v1453
    %v1598 = vadd.f32 %v1597, %v1455
    %v1599 = vadd.f32 %v1598, %v1457
    %v1600 = vadd.f32 %v1599, %v1459
    %v1601 = vadd.f32 %v1600, %v1461
    %v1602 = vadd.f32 %v1601, %v1463
    %v1603 = vadd.f32 %v1602, %v1465
    %v1604 = vadd.f32 %v1603, %v1467
    %v1605 = vadd.f32 %v1604, %v1469
    %v1606 = vadd.f32 %v1605, %v1471
    %v1607 = vadd.f32 %v1606, %v1473
    %v1608 = vadd.f32 %v1607, %v1475
    %v1609 = vadd.f32 %v1608, %v1477
    %v1610 = vrot.slane %v1609, 4
    %v1611 = vadd.f32 %v1609, %v1610
    %v1612 = vrot.slane %v1611, 2
    %v1613 = vadd.f32 %v1611, %v1612
    %v1614 = vrot.slane %v1613, 1
    %v1615 = vadd.f32 %v1613, %v1614
    %v1618 = vcombine.low %v1546, %v1615
    %v1620 = vunpack.c.l.s4 1966171168
    %v1621 = vunpack.c.0.s8 %v1620
    %v1622 = vlaneseq
    %v1623 = vshrl.u32 %v1622, 7
    %v1624 = vsub.s32 %v1621, %v1623
    %v1625 = vrot.slane %v1618, %v1624
    %v1627 = vunpack.c.l.s4 1966171168
    %v1628 = vunpack.c.0.s8 %v1627
    %v1629 = vlaneseq
    %v1630 = vshrl.u32 %v1629, 7
    %v1631 = vsub.s32 %v1628, %v1630
    %v1632 = vrot.slane %v1625, %v1631
    %v1634 = vadd.f32 %v1213, %v1632
    %v1635 = vlaneseq
    %vm1636 = vcmp.ge.s32.totalorder %v1635, 0
    %vm1637 = vcmp.lt.s32.totalorder %v1635, 256
    %vm1638 = vmand %vm1636, %vm1637
    %1639 = vst.msk [vmem:[#allocation4] sm:$0x3] %vm1638, %v1634
    %v1640 = vld [vmem:[#allocation2] sm:$0x3]
    %v1641 = vmax.f32 %v1084, %v1088
    %v1642 = vmax.f32 %v1086, %v1090
    %v1643 = vmax.f32 %v1641, %v1092
    %v1644 = vmax.f32 %v1642, %v1094
    %v1645 = vmax.f32 %v1643, %v1096
    %v1646 = vmax.f32 %v1644, %v1098
    %v1647 = vmax.f32 %v1645, %v1100
    %v1648 = vmax.f32 %v1646, %v1102
    %v1649 = vmax.f32 %v1647, %v1104
    %v1650 = vmax.f32 %v1648, %v1106
    %v1651 = vmax.f32 %v1649, %v1108
    %v1652 = vmax.f32 %v1650, %v1110
    %v1653 = vmax.f32 %v1651, %v1112
    %v1654 = vmax.f32 %v1652, %v1114
    %v1655 = vmax.f32 %v1653, %v1116
    %v1656 = vmax.f32 %v1654, %v1118
    %v1657 = vmax.f32 %v1655, %v1120
    %v1658 = vmax.f32 %v1656, %v1122
    %v1659 = vmax.f32 %v1657, %v1124
    %v1660 = vmax.f32 %v1658, %v1126
    %v1661 = vmax.f32 %v1659, %v1128
    %v1662 = vmax.f32 %v1660, %v1130
    %v1663 = vmax.f32 %v1661, %v1132
    %v1664 = vmax.f32 %v1662, %v1134
    %v1665 = vmax.f32 %v1663, %v1136
    %v1666 = vmax.f32 %v1664, %v1138
    %v1667 = vmax.f32 %v1665, %v1140
    %v1668 = vmax.f32 %v1666, %v1142
    %v1669 = vmax.f32 %v1667, %v1144
    %v1670 = vmax.f32 %v1668, %v1146
    %v1671 = vmax.f32 %v1669, %v1148
    %v1672 = vmax.f32 %v1670, %v1150
    %v1673 = vmax.f32 %v1671, %v1152
    %v1674 = vmax.f32 %v1672, %v1154
    %v1675 = vmax.f32 %v1673, %v1156
    %v1676 = vmax.f32 %v1674, %v1158
    %v1677 = vmax.f32 %v1675, %v1160
    %v1678 = vmax.f32 %v1676, %v1162
    %v1679 = vmax.f32 %v1677, %v1164
    %v1680 = vmax.f32 %v1678, %v1166
    %v1681 = vmax.f32 %v1679, %v1168
    %v1682 = vmax.f32 %v1680, %v1170
    %v1683 = vmax.f32 %v1681, %v1172
    %v1684 = vmax.f32 %v1682, %v1174
    %v1685 = vmax.f32 %v1683, %v1176
    %v1686 = vmax.f32 %v1684, %v1178
    %v1687 = vmax.f32 %v1685, %v1180
    %v1688 = vmax.f32 %v1686, %v1182
    %v1689 = vmax.f32 %v1687, %v1184
    %v1690 = vmax.f32 %v1688, %v1186
    %v1691 = vmax.f32 %v1689, %v1188
    %v1692 = vmax.f32 %v1690, %v1190
    %v1693 = vmax.f32 %v1691, %v1192
    %v1694 = vmax.f32 %v1692, %v1194
    %v1695 = vmax.f32 %v1693, %v1196
    %v1696 = vmax.f32 %v1694, %v1198
    %v1697 = vmax.f32 %v1695, %v1200
    %v1698 = vmax.f32 %v1696, %v1202
    %v1699 = vmax.f32 %v1697, %v1204
    %v1700 = vmax.f32 %v1698, %v1206
    %v1701 = vmax.f32 %v1699, %v1208
    %v1702 = vmax.f32 %v1700, %v1210
    %v1703 = vmax.f32 %v1701, %v1702
    %v1704 = vrot.slane %v1703, 4
    %v1705 = vmax.f32 %v1703, %v1704
    %v1706 = vrot.slane %v1705, 2
    %v1707 = vmax.f32 %v1705, %v1706
    %v1708 = vrot.slane %v1707, 1
    %v1709 = vmax.f32 %v1707, %v1708
    %v1710 = vmax.f32 %v1085, %v1089
    %v1711 = vmax.f32 %v1087, %v1091
    %v1712 = vmax.f32 %v1710, %v1093
    %v1713 = vmax.f32 %v1711, %v1095
    %v1714 = vmax.f32 %v1712, %v1097
    %v1715 = vmax.f32 %v1713, %v1099
    %v1716 = vmax.f32 %v1714, %v1101
    %v1717 = vmax.f32 %v1715, %v1103
    %v1718 = vmax.f32 %v1716, %v1105
    %v1719 = vmax.f32 %v1717, %v1107
    %v1720 = vmax.f32 %v1718, %v1109
    %v1721 = vmax.f32 %v1719, %v1111
    %v1722 = vmax.f32 %v1720, %v1113
    %v1723 = vmax.f32 %v1721, %v1115
    %v1724 = vmax.f32 %v1722, %v1117
    %v1725 = vmax.f32 %v1723, %v1119
    %v1726 = vmax.f32 %v1724, %v1121
    %v1727 = vmax.f32 %v1725, %v1123
    %v1728 = vmax.f32 %v1726, %v1125
    %v1729 = vmax.f32 %v1727, %v1127
    %v1730 = vmax.f32 %v1728, %v1129
    %v1731 = vmax.f32 %v1729, %v1131
    %v1732 = vmax.f32 %v1730, %v1133
    %v1733 = vmax.f32 %v1731, %v1135
    %v1734 = vmax.f32 %v1732, %v1137
    %v1735 = vmax.f32 %v1733, %v1139
    %v1736 = vmax.f32 %v1734, %v1141
    %v1737 = vmax.f32 %v1735, %v1143
    %v1738 = vmax.f32 %v1736, %v1145
    %v1739 = vmax.f32 %v1737, %v1147
    %v1740 = vmax.f32 %v1738, %v1149
    %v1741 = vmax.f32 %v1739, %v1151
    %v1742 = vmax.f32 %v1740, %v1153
    %v1743 = vmax.f32 %v1741, %v1155
    %v1744 = vmax.f32 %v1742, %v1157
    %v1745 = vmax.f32 %v1743, %v1159
    %v1746 = vmax.f32 %v1744, %v1161
    %v1747 = vmax.f32 %v1745, %v1163
    %v1748 = vmax.f32 %v1746, %v1165
    %v1749 = vmax.f32 %v1747, %v1167
    %v1750 = vmax.f32 %v1748, %v1169
    %v1751 = vmax.f32 %v1749, %v1171
    %v1752 = vmax.f32 %v1750, %v1173
    %v1753 = vmax.f32 %v1751, %v1175
    %v1754 = vmax.f32 %v1752, %v1177
    %v1755 = vmax.f32 %v1753, %v1179
    %v1756 = vmax.f32 %v1754, %v1181
    %v1757 = vmax.f32 %v1755, %v1183
    %v1758 = vmax.f32 %v1756, %v1185
    %v1759 = vmax.f32 %v1757, %v1187
    %v1760 = vmax.f32 %v1758, %v1189
    %v1761 = vmax.f32 %v1759, %v1191
    %v1762 = vmax.f32 %v1760, %v1193
    %v1763 = vmax.f32 %v1761, %v1195
    %v1764 = vmax.f32 %v1762, %v1197
    %v1765 = vmax.f32 %v1763, %v1199
    %v1766 = vmax.f32 %v1764, %v1201
    %v1767 = vmax.f32 %v1765, %v1203
    %v1768 = vmax.f32 %v1766, %v1205
    %v1769 = vmax.f32 %v1767, %v1207
    %v1770 = vmax.f32 %v1768, %v1209
    %v1771 = vmax.f32 %v1769, %v1211
    %v1772 = vmax.f32 %v1770, %v1771
    %v1773 = vrot.slane %v1772, 4
    %v1774 = vmax.f32 %v1772, %v1773
    %v1775 = vrot.slane %v1774, 2
    %v1776 = vmax.f32 %v1774, %v1775
    %v1777 = vrot.slane %v1776, 1
    %v1778 = vmax.f32 %v1776, %v1777
    %v1781 = vcombine.low %v1709, %v1778
    %v1783 = vunpack.c.l.s4 1966171168
    %v1784 = vunpack.c.0.s8 %v1783
    %v1785 = vlaneseq
    %v1786 = vshrl.u32 %v1785, 7
    %v1787 = vsub.s32 %v1784, %v1786
    %v1788 = vrot.slane %v1781, %v1787
    %v1790 = vunpack.c.l.s4 1966171168
    %v1791 = vunpack.c.0.s8 %v1790
    %v1792 = vlaneseq
    %v1793 = vshrl.u32 %v1792, 7
    %v1794 = vsub.s32 %v1791, %v1793
    %v1795 = vrot.slane %v1788, %v1794
    %v1797 = vmax.f32 %v1640, %v1795
    %v1798 = vld [vmem:[#allocation3] sm:$0x3]
    %v1799 = vsub.f32 %v1640, %v1797
    %v1800 = vmul.f32 %v1799, 1.442695
    %v1801 = vpow.pop %v1800
    %v1802 = vmul.f32 %v1798, %v1801
    %v1804 = vlaneseq
    %v1805 = vshrl.u32 %v1804, 7
    %v1806 = vsub.s32 0, %v1805
    %v1807 = vrot.slane %v1797, %v1806
    %v1808 = vlaneseq
    %v1809 = vshrl.u32 %v1808, 7
    %v1810 = vsub.s32 1, %v1809
    %v1811 = vrot.slane %v1797, %v1810
    %v1814 = vsub.f32 %v1084, %v1807
    %v1815 = vsub.f32 %v1085, %v1811
    %v1816 = vsub.f32 %v1086, %v1807
    %v1817 = vsub.f32 %v1087, %v1811
    %v1818 = vsub.f32 %v1088, %v1807
    %v1819 = vsub.f32 %v1089, %v1811
    %v1820 = vsub.f32 %v1090, %v1807
    %v1821 = vsub.f32 %v1091, %v1811
    %v1822 = vsub.f32 %v1092, %v1807
    %v1823 = vsub.f32 %v1093, %v1811
    %v1824 = vsub.f32 %v1094, %v1807
    %v1825 = vsub.f32 %v1095, %v1811
    %v1826 = vsub.f32 %v1096, %v1807
    %v1827 = vsub.f32 %v1097, %v1811
    %v1828 = vsub.f32 %v1098, %v1807
    %v1829 = vsub.f32 %v1099, %v1811
    %v1830 = vsub.f32 %v1100, %v1807
    %v1831 = vsub.f32 %v1101, %v1811
    %v1832 = vsub.f32 %v1102, %v1807
    %v1833 = vsub.f32 %v1103, %v1811
    %v1834 = vsub.f32 %v1104, %v1807
    %v1835 = vsub.f32 %v1105, %v1811
    %v1836 = vsub.f32 %v1106, %v1807
    %v1837 = vsub.f32 %v1107, %v1811
    %v1838 = vsub.f32 %v1108, %v1807
    %v1839 = vsub.f32 %v1109, %v1811
    %v1840 = vsub.f32 %v1110, %v1807
    %v1841 = vsub.f32 %v1111, %v1811
    %v1842 = vsub.f32 %v1112, %v1807
    %v1843 = vsub.f32 %v1113, %v1811
    %v1844 = vsub.f32 %v1114, %v1807
    %v1845 = vsub.f32 %v1115, %v1811
    %v1846 = vsub.f32 %v1116, %v1807
    %v1847 = vsub.f32 %v1117, %v1811
    %v1848 = vsub.f32 %v1118, %v1807
    %v1849 = vsub.f32 %v1119, %v1811
    %v1850 = vsub.f32 %v1120, %v1807
    %v1851 = vsub.f32 %v1121, %v1811
    %v1852 = vsub.f32 %v1122, %v1807
    %v1853 = vsub.f32 %v1123, %v1811
    %v1854 = vsub.f32 %v1124, %v1807
    %v1855 = vsub.f32 %v1125, %v1811
    %v1856 = vsub.f32 %v1126, %v1807
    %v1857 = vsub.f32 %v1127, %v1811
    %v1858 = vsub.f32 %v1128, %v1807
    %v1859 = vsub.f32 %v1129, %v1811
    %v1860 = vsub.f32 %v1130, %v1807
    %v1861 = vsub.f32 %v1131, %v1811
    %v1862 = vsub.f32 %v1132, %v1807
    %v1863 = vsub.f32 %v1133, %v1811
    %v1864 = vsub.f32 %v1134, %v1807
    %v1865 = vsub.f32 %v1135, %v1811
    %v1866 = vsub.f32 %v1136, %v1807
    %v1867 = vsub.f32 %v1137, %v1811
    %v1868 = vsub.f32 %v1138, %v1807
    %v1869 = vsub.f32 %v1139, %v1811
    %v1870 = vsub.f32 %v1140, %v1807
    %v1871 = vsub.f32 %v1141, %v1811
    %v1872 = vsub.f32 %v1142, %v1807
    %v1873 = vsub.f32 %v1143, %v1811
    %v1874 = vsub.f32 %v1144, %v1807
    %v1875 = vsub.f32 %v1145, %v1811
    %v1876 = vsub.f32 %v1146, %v1807
    %v1877 = vsub.f32 %v1147, %v1811
    %v1878 = vsub.f32 %v1148, %v1807
    %v1879 = vsub.f32 %v1149, %v1811
    %v1880 = vsub.f32 %v1150, %v1807
    %v1881 = vsub.f32 %v1151, %v1811
    %v1882 = vsub.f32 %v1152, %v1807
    %v1883 = vsub.f32 %v1153, %v1811
    %v1884 = vsub.f32 %v1154, %v1807
    %v1885 = vsub.f32 %v1155, %v1811
    %v1886 = vsub.f32 %v1156, %v1807
    %v1887 = vsub.f32 %v1157, %v1811
    %v1888 = vsub.f32 %v1158, %v1807
    %v1889 = vsub.f32 %v1159, %v1811
    %v1890 = vsub.f32 %v1160, %v1807
    %v1891 = vsub.f32 %v1161, %v1811
    %v1892 = vsub.f32 %v1162, %v1807
    %v1893 = vsub.f32 %v1163, %v1811
    %v1894 = vsub.f32 %v1164, %v1807
    %v1895 = vsub.f32 %v1165, %v1811
    %v1896 = vsub.f32 %v1166, %v1807
    %v1897 = vsub.f32 %v1167, %v1811
    %v1898 = vsub.f32 %v1168, %v1807
    %v1899 = vsub.f32 %v1169, %v1811
    %v1900 = vsub.f32 %v1170, %v1807
    %v1901 = vsub.f32 %v1171, %v1811
    %v1902 = vsub.f32 %v1172, %v1807
    %v1903 = vsub.f32 %v1173, %v1811
    %v1904 = vsub.f32 %v1174, %v1807
    %v1905 = vsub.f32 %v1175, %v1811
    %v1906 = vsub.f32 %v1176, %v1807
    %v1907 = vsub.f32 %v1177, %v1811
    %v1908 = vsub.f32 %v1178, %v1807
    %v1909 = vsub.f32 %v1179, %v1811
    %v1910 = vsub.f32 %v1180, %v1807
    %v1911 = vsub.f32 %v1181, %v1811
    %v1912 = vsub.f32 %v1182, %v1807
    %v1913 = vsub.f32 %v1183, %v1811
    %v1914 = vsub.f32 %v1184, %v1807
    %v1915 = vsub.f32 %v1185, %v1811
    %v1916 = vsub.f32 %v1186, %v1807
    %v1917 = vsub.f32 %v1187, %v1811
    %v1918 = vsub.f32 %v1188, %v1807
    %v1919 = vsub.f32 %v1189, %v1811
    %v1920 = vsub.f32 %v1190, %v1807
    %v1921 = vsub.f32 %v1191, %v1811
    %v1922 = vsub.f32 %v1192, %v1807
    %v1923 = vsub.f32 %v1193, %v1811
    %v1924 = vsub.f32 %v1194, %v1807
    %v1925 = vsub.f32 %v1195, %v1811
    %v1926 = vsub.f32 %v1196, %v1807
    %v1927 = vsub.f32 %v1197, %v1811
    %v1928 = vsub.f32 %v1198, %v1807
    %v1929 = vsub.f32 %v1199, %v1811
    %v1930 = vsub.f32 %v1200, %v1807
    %v1931 = vsub.f32 %v1201, %v1811
    %v1932 = vsub.f32 %v1202, %v1807
    %v1933 = vsub.f32 %v1203, %v1811
    %v1934 = vsub.f32 %v1204, %v1807
    %v1935 = vsub.f32 %v1205, %v1811
    %v1936 = vsub.f32 %v1206, %v1807
    %v1937 = vsub.f32 %v1207, %v1811
    %v1938 = vsub.f32 %v1208, %v1807
    %v1939 = vsub.f32 %v1209, %v1811
    %v1940 = vsub.f32 %v1210, %v1807
    %v1941 = vsub.f32 %v1211, %v1811
    %v1942 = vmul.f32 %v1814, 1.442695
    %v1943 = vpow.pop %v1942
    %v1944 = vmul.f32 %v1815, 1.442695
    %v1945 = vpow.pop %v1944
    %v1946 = vmul.f32 %v1816, 1.442695
    %v1947 = vpow.pop %v1946
    %v1948 = vmul.f32 %v1817, 1.442695
    %v1949 = vpow.pop %v1948
    %v1950 = vmul.f32 %v1818, 1.442695
    %v1951 = vpow.pop %v1950
    %v1952 = vmul.f32 %v1819, 1.442695
    %v1953 = vpow.pop %v1952
    %v1954 = vmul.f32 %v1820, 1.442695
    %v1955 = vpow.pop %v1954
    %v1956 = vmul.f32 %v1821, 1.442695
    %v1957 = vpow.pop %v1956
    %v1958 = vmul.f32 %v1822, 1.442695
    %v1959 = vpow.pop %v1958
    %v1960 = vmul.f32 %v1823, 1.442695
    %v1961 = vpow.pop %v1960
    %v1962 = vmul.f32 %v1824, 1.442695
    %v1963 = vpow.pop %v1962
    %v1964 = vmul.f32 %v1825, 1.442695
    %v1965 = vpow.pop %v1964
    %v1966 = vmul.f32 %v1826, 1.442695
    %v1967 = vpow.pop %v1966
    %v1968 = vmul.f32 %v1827, 1.442695
    %v1969 = vpow.pop %v1968
    %v1970 = vmul.f32 %v1828, 1.442695
    %v1971 = vpow.pop %v1970
    %v1972 = vmul.f32 %v1829, 1.442695
    %v1973 = vpow.pop %v1972
    %v1974 = vmul.f32 %v1830, 1.442695
    %v1975 = vpow.pop %v1974
    %v1976 = vmul.f32 %v1831, 1.442695
    %v1977 = vpow.pop %v1976
    %v1978 = vmul.f32 %v1832, 1.442695
    %v1979 = vpow.pop %v1978
    %v1980 = vmul.f32 %v1833, 1.442695
    %v1981 = vpow.pop %v1980
    %v1982 = vmul.f32 %v1834, 1.442695
    %v1983 = vpow.pop %v1982
    %v1984 = vmul.f32 %v1835, 1.442695
    %v1985 = vpow.pop %v1984
    %v1986 = vmul.f32 %v1836, 1.442695
    %v1987 = vpow.pop %v1986
    %v1988 = vmul.f32 %v1837, 1.442695
    %v1989 = vpow.pop %v1988
    %v1990 = vmul.f32 %v1838, 1.442695
    %v1991 = vpow.pop %v1990
    %v1992 = vmul.f32 %v1839, 1.442695
    %v1993 = vpow.pop %v1992
    %v1994 = vmul.f32 %v1840, 1.442695
    %v1995 = vpow.pop %v1994
    %v1996 = vmul.f32 %v1841, 1.442695
    %v1997 = vpow.pop %v1996
    %v1998 = vmul.f32 %v1842, 1.442695
    %v1999 = vpow.pop %v1998
    %v2000 = vmul.f32 %v1843, 1.442695
    %v2001 = vpow.pop %v2000
    %v2002 = vmul.f32 %v1844, 1.442695
    %v2003 = vpow.pop %v2002
    %v2004 = vmul.f32 %v1845, 1.442695
    %v2005 = vpow.pop %v2004
    %v2006 = vmul.f32 %v1846, 1.442695
    %v2007 = vpow.pop %v2006
    %v2008 = vmul.f32 %v1847, 1.442695
    %v2009 = vpow.pop %v2008
    %v2010 = vmul.f32 %v1848, 1.442695
    %v2011 = vpow.pop %v2010
    %v2012 = vmul.f32 %v1849, 1.442695
    %v2013 = vpow.pop %v2012
    %v2014 = vmul.f32 %v1850, 1.442695
    %v2015 = vpow.pop %v2014
    %v2016 = vmul.f32 %v1851, 1.442695
    %v2017 = vpow.pop %v2016
    %v2018 = vmul.f32 %v1852, 1.442695
    %v2019 = vpow.pop %v2018
    %v2020 = vmul.f32 %v1853, 1.442695
    %v2021 = vpow.pop %v2020
    %v2022 = vmul.f32 %v1854, 1.442695
    %v2023 = vpow.pop %v2022
    %v2024 = vmul.f32 %v1855, 1.442695
    %v2025 = vpow.pop %v2024
    %v2026 = vmul.f32 %v1856, 1.442695
    %v2027 = vpow.pop %v2026
    %v2028 = vmul.f32 %v1857, 1.442695
    %v2029 = vpow.pop %v2028
    %v2030 = vmul.f32 %v1858, 1.442695
    %v2031 = vpow.pop %v2030
    %v2032 = vmul.f32 %v1859, 1.442695
    %v2033 = vpow.pop %v2032
    %v2034 = vmul.f32 %v1860, 1.442695
    %v2035 = vpow.pop %v2034
    %v2036 = vmul.f32 %v1861, 1.442695
    %v2037 = vpow.pop %v2036
    %v2038 = vmul.f32 %v1862, 1.442695
    %v2039 = vpow.pop %v2038
    %v2040 = vmul.f32 %v1863, 1.442695
    %v2041 = vpow.pop %v2040
    %v2042 = vmul.f32 %v1864, 1.442695
    %v2043 = vpow.pop %v2042
    %v2044 = vmul.f32 %v1865, 1.442695
    %v2045 = vpow.pop %v2044
    %v2046 = vmul.f32 %v1866, 1.442695
    %v2047 = vpow.pop %v2046
    %v2048 = vmul.f32 %v1867, 1.442695
    %v2049 = vpow.pop %v2048
    %v2050 = vmul.f32 %v1868, 1.442695
    %v2051 = vpow.pop %v2050
    %v2052 = vmul.f32 %v1869, 1.442695
    %v2053 = vpow.pop %v2052
    %v2054 = vmul.f32 %v1870, 1.442695
    %v2055 = vpow.pop %v2054
    %v2056 = vmul.f32 %v1871, 1.442695
    %v2057 = vpow.pop %v2056
    %v2058 = vmul.f32 %v1872, 1.442695
    %v2059 = vpow.pop %v2058
    %v2060 = vmul.f32 %v1873, 1.442695
    %v2061 = vpow.pop %v2060
    %v2062 = vmul.f32 %v1874, 1.442695
    %v2063 = vpow.pop %v2062
    %v2064 = vmul.f32 %v1875, 1.442695
    %v2065 = vpow.pop %v2064
    %v2066 = vmul.f32 %v1876, 1.442695
    %v2067 = vpow.pop %v2066
    %v2068 = vmul.f32 %v1877, 1.442695
    %v2069 = vpow.pop %v2068
    %v2070 = vmul.f32 %v1878, 1.442695
    %v2071 = vpow.pop %v2070
    %v2072 = vmul.f32 %v1879, 1.442695
    %v2073 = vpow.pop %v2072
    %v2074 = vmul.f32 %v1880, 1.442695
    %v2075 = vpow.pop %v2074
    %v2076 = vmul.f32 %v1881, 1.442695
    %v2077 = vpow.pop %v2076
    %v2078 = vmul.f32 %v1882, 1.442695
    %v2079 = vpow.pop %v2078
    %v2080 = vmul.f32 %v1883, 1.442695
    %v2081 = vpow.pop %v2080
    %v2082 = vmul.f32 %v1884, 1.442695
    %v2083 = vpow.pop %v2082
    %v2084 = vmul.f32 %v1885, 1.442695
    %v2085 = vpow.pop %v2084
    %v2086 = vmul.f32 %v1886, 1.442695
    %v2087 = vpow.pop %v2086
    %v2088 = vmul.f32 %v1887, 1.442695
    %v2089 = vpow.pop %v2088
    %v2090 = vmul.f32 %v1888, 1.442695
    %v2091 = vpow.pop %v2090
    %v2092 = vmul.f32 %v1889, 1.442695
    %v2093 = vpow.pop %v2092
    %v2094 = vmul.f32 %v1890, 1.442695
    %v2095 = vpow.pop %v2094
    %v2096 = vmul.f32 %v1891, 1.442695
    %v2097 = vpow.pop %v2096
    %v2098 = vmul.f32 %v1892, 1.442695
    %v2099 = vpow.pop %v2098
    %v2100 = vmul.f32 %v1893, 1.442695
    %v2101 = vpow.pop %v2100
    %v2102 = vmul.f32 %v1894, 1.442695
    %v2103 = vpow.pop %v2102
    %v2104 = vmul.f32 %v1895, 1.442695
    %v2105 = vpow.pop %v2104
    %v2106 = vmul.f32 %v1896, 1.442695
    %v2107 = vpow.pop %v2106
    %v2108 = vmul.f32 %v1897, 1.442695
    %v2109 = vpow.pop %v2108
    %v2110 = vmul.f32 %v1898, 1.442695
    %v2111 = vpow.pop %v2110
    %v2112 = vmul.f32 %v1899, 1.442695
    %v2113 = vpow.pop %v2112
    %v2114 = vmul.f32 %v1900, 1.442695
    %v2115 = vpow.pop %v2114
    %v2116 = vmul.f32 %v1901, 1.442695
    %v2117 = vpow.pop %v2116
    %v2118 = vmul.f32 %v1902, 1.442695
    %v2119 = vpow.pop %v2118
    %v2120 = vmul.f32 %v1903, 1.442695
    %v2121 = vpow.pop %v2120
    %v2122 = vmul.f32 %v1904, 1.442695
    %v2123 = vpow.pop %v2122
    %v2124 = vmul.f32 %v1905, 1.442695
    %v2125 = vpow.pop %v2124
    %v2126 = vmul.f32 %v1906, 1.442695
    %v2127 = vpow.pop %v2126
    %v2128 = vmul.f32 %v1907, 1.442695
    %v2129 = vpow.pop %v2128
    %v2130 = vmul.f32 %v1908, 1.442695
    %v2131 = vpow.pop %v2130
    %v2132 = vmul.f32 %v1909, 1.442695
    %v2133 = vpow.pop %v2132
    %v2134 = vmul.f32 %v1910, 1.442695
    %v2135 = vpow.pop %v2134
    %v2136 = vmul.f32 %v1911, 1.442695
    %v2137 = vpow.pop %v2136
    %v2138 = vmul.f32 %v1912, 1.442695
    %v2139 = vpow.pop %v2138
    %v2140 = vmul.f32 %v1913, 1.442695
    %v2141 = vpow.pop %v2140
    %v2142 = vmul.f32 %v1914, 1.442695
    %v2143 = vpow.pop %v2142
    %v2144 = vmul.f32 %v1915, 1.442695
    %v2145 = vpow.pop %v2144
    %v2146 = vmul.f32 %v1916, 1.442695
    %v2147 = vpow.pop %v2146
    %v2148 = vmul.f32 %v1917, 1.442695
    %v2149 = vpow.pop %v2148
    %v2150 = vmul.f32 %v1918, 1.442695
    %v2151 = vpow.pop %v2150
    %v2152 = vmul.f32 %v1919, 1.442695
    %v2153 = vpow.pop %v2152
    %v2154 = vmul.f32 %v1920, 1.442695
    %v2155 = vpow.pop %v2154
    %v2156 = vmul.f32 %v1921, 1.442695
    %v2157 = vpow.pop %v2156
    %v2158 = vmul.f32 %v1922, 1.442695
    %v2159 = vpow.pop %v2158
    %v2160 = vmul.f32 %v1923, 1.442695
    %v2161 = vpow.pop %v2160
    %v2162 = vmul.f32 %v1924, 1.442695
    %v2163 = vpow.pop %v2162
    %v2164 = vmul.f32 %v1925, 1.442695
    %v2165 = vpow.pop %v2164
    %v2166 = vmul.f32 %v1926, 1.442695
    %v2167 = vpow.pop %v2166
    %v2168 = vmul.f32 %v1927, 1.442695
    %v2169 = vpow.pop %v2168
    %v2170 = vmul.f32 %v1928, 1.442695
    %v2171 = vpow.pop %v2170
    %v2172 = vmul.f32 %v1929, 1.442695
    %v2173 = vpow.pop %v2172
    %v2174 = vmul.f32 %v1930, 1.442695
    %v2175 = vpow.pop %v2174
    %v2176 = vmul.f32 %v1931, 1.442695
    %v2177 = vpow.pop %v2176
    %v2178 = vmul.f32 %v1932, 1.442695
    %v2179 = vpow.pop %v2178
    %v2180 = vmul.f32 %v1933, 1.442695
    %v2181 = vpow.pop %v2180
    %v2182 = vmul.f32 %v1934, 1.442695
    %v2183 = vpow.pop %v2182
    %v2184 = vmul.f32 %v1935, 1.442695
    %v2185 = vpow.pop %v2184
    %v2186 = vmul.f32 %v1936, 1.442695
    %v2187 = vpow.pop %v2186
    %v2188 = vmul.f32 %v1937, 1.442695
    %v2189 = vpow.pop %v2188
    %v2190 = vmul.f32 %v1938, 1.442695
    %v2191 = vpow.pop %v2190
    %v2192 = vmul.f32 %v1939, 1.442695
    %v2193 = vpow.pop %v2192
    %v2194 = vmul.f32 %v1940, 1.442695
    %v2195 = vpow.pop %v2194
    %v2196 = vmul.f32 %v1941, 1.442695
    %v2197 = vpow.pop %v2196
    %v2198 = vadd.f32 %v1943, %v1947
    %v2199 = vadd.f32 %v2198, %v1951
    %v2200 = vadd.f32 %v2199, %v1955
    %v2201 = vadd.f32 %v2200, %v1959
    %v2202 = vadd.f32 %v2201, %v1963
    %v2203 = vadd.f32 %v2202, %v1967
    %v2204 = vadd.f32 %v2203, %v1971
    %v2205 = vadd.f32 %v2204, %v1975
    %v2206 = vadd.f32 %v2205, %v1979
    %v2207 = vadd.f32 %v2206, %v1983
    %v2208 = vadd.f32 %v2207, %v1987
    %v2209 = vadd.f32 %v2208, %v1991
    %v2210 = vadd.f32 %v2209, %v1995
    %v2211 = vadd.f32 %v2210, %v1999
    %v2212 = vadd.f32 %v2211, %v2003
    %v2213 = vadd.f32 %v2212, %v2007
    %v2214 = vadd.f32 %v2213, %v2011
    %v2215 = vadd.f32 %v2214, %v2015
    %v2216 = vadd.f32 %v2215, %v2019
    %v2217 = vadd.f32 %v2216, %v2023
    %v2218 = vadd.f32 %v2217, %v2027
    %v2219 = vadd.f32 %v2218, %v2031
    %v2220 = vadd.f32 %v2219, %v2035
    %v2221 = vadd.f32 %v2220, %v2039
    %v2222 = vadd.f32 %v2221, %v2043
    %v2223 = vadd.f32 %v2222, %v2047
    %v2224 = vadd.f32 %v2223, %v2051
    %v2225 = vadd.f32 %v2224, %v2055
    %v2226 = vadd.f32 %v2225, %v2059
    %v2227 = vadd.f32 %v2226, %v2063
    %v2228 = vadd.f32 %v2227, %v2067
    %v2229 = vadd.f32 %v2228, %v2071
    %v2230 = vadd.f32 %v2229, %v2075
    %v2231 = vadd.f32 %v2230, %v2079
    %v2232 = vadd.f32 %v2231, %v2083
    %v2233 = vadd.f32 %v2232, %v2087
    %v2234 = vadd.f32 %v2233, %v2091
    %v2235 = vadd.f32 %v2234, %v2095
    %v2236 = vadd.f32 %v2235, %v2099
    %v2237 = vadd.f32 %v2236, %v2103
    %v2238 = vadd.f32 %v2237, %v2107
    %v2239 = vadd.f32 %v2238, %v2111
    %v2240 = vadd.f32 %v2239, %v2115
    %v2241 = vadd.f32 %v2240, %v2119
    %v2242 = vadd.f32 %v2241, %v2123
    %v2243 = vadd.f32 %v2242, %v2127
    %v2244 = vadd.f32 %v2243, %v2131
    %v2245 = vadd.f32 %v2244, %v2135
    %v2246 = vadd.f32 %v2245, %v2139
    %v2247 = vadd.f32 %v2246, %v2143
    %v2248 = vadd.f32 %v2247, %v2147
    %v2249 = vadd.f32 %v2248, %v2151
    %v2250 = vadd.f32 %v2249, %v2155
    %v2251 = vadd.f32 %v2250, %v2159
    %v2252 = vadd.f32 %v2251, %v2163
    %v2253 = vadd.f32 %v2252, %v2167
    %v2254 = vadd.f32 %v2253, %v2171
    %v2255 = vadd.f32 %v2254, %v2175
    %v2256 = vadd.f32 %v2255, %v2179
    %v2257 = vadd.f32 %v2256, %v2183
    %v2258 = vadd.f32 %v2257, %v2187
    %v2259 = vadd.f32 %v2258, %v2191
    %v2260 = vadd.f32 %v2259, %v2195
    %v2261 = vrot.slane %v2260, 4
    %v2262 = vadd.f32 %v2260, %v2261
    %v2263 = vrot.slane %v2262, 2
    %v2264 = vadd.f32 %v2262, %v2263
    %v2265 = vrot.slane %v2264, 1
    %v2266 = vadd.f32 %v2264, %v2265
    %v2267 = vadd.f32 %v1945, %v1949
    %v2268 = vadd.f32 %v2267, %v1953
    %v2269 = vadd.f32 %v2268, %v1957
    %v2270 = vadd.f32 %v2269, %v1961
    %v2271 = vadd.f32 %v2270, %v1965
    %v2272 = vadd.f32 %v2271, %v1969
    %v2273 = vadd.f32 %v2272, %v1973
    %v2274 = vadd.f32 %v2273, %v1977
    %v2275 = vadd.f32 %v2274, %v1981
    %v2276 = vadd.f32 %v2275, %v1985
    %v2277 = vadd.f32 %v2276, %v1989
    %v2278 = vadd.f32 %v2277, %v1993
    %v2279 = vadd.f32 %v2278, %v1997
    %v2280 = vadd.f32 %v2279, %v2001
    %v2281 = vadd.f32 %v2280, %v2005
    %v2282 = vadd.f32 %v2281, %v2009
    %v2283 = vadd.f32 %v2282, %v2013
    %v2284 = vadd.f32 %v2283, %v2017
    %v2285 = vadd.f32 %v2284, %v2021
    %v2286 = vadd.f32 %v2285, %v2025
    %v2287 = vadd.f32 %v2286, %v2029
    %v2288 = vadd.f32 %v2287, %v2033
    %v2289 = vadd.f32 %v2288, %v2037
    %v2290 = vadd.f32 %v2289, %v2041
    %v2291 = vadd.f32 %v2290, %v2045
    %v2292 = vadd.f32 %v2291, %v2049
    %v2293 = vadd.f32 %v2292, %v2053
    %v2294 = vadd.f32 %v2293, %v2057
    %v2295 = vadd.f32 %v2294, %v2061
    %v2296 = vadd.f32 %v2295, %v2065
    %v2297 = vadd.f32 %v2296, %v2069
    %v2298 = vadd.f32 %v2297, %v2073
    %v2299 = vadd.f32 %v2298, %v2077
    %v2300 = vadd.f32 %v2299, %v2081
    %v2301 = vadd.f32 %v2300, %v2085
    %v2302 = vadd.f32 %v2301, %v2089
    %v2303 = vadd.f32 %v2302, %v2093
    %v2304 = vadd.f32 %v2303, %v2097
    %v2305 = vadd.f32 %v2304, %v2101
    %v2306 = vadd.f32 %v2305, %v2105
    %v2307 = vadd.f32 %v2306, %v2109
    %v2308 = vadd.f32 %v2307, %v2113
    %v2309 = vadd.f32 %v2308, %v2117
    %v2310 = vadd.f32 %v2309, %v2121
    %v2311 = vadd.f32 %v2310, %v2125
    %v2312 = vadd.f32 %v2311, %v2129
    %v2313 = vadd.f32 %v2312, %v2133
    %v2314 = vadd.f32 %v2313, %v2137
    %v2315 = vadd.f32 %v2314, %v2141
    %v2316 = vadd.f32 %v2315, %v2145
    %v2317 = vadd.f32 %v2316, %v2149
    %v2318 = vadd.f32 %v2317, %v2153
    %v2319 = vadd.f32 %v2318, %v2157
    %v2320 = vadd.f32 %v2319, %v2161
    %v2321 = vadd.f32 %v2320, %v2165
    %v2322 = vadd.f32 %v2321, %v2169
    %v2323 = vadd.f32 %v2322, %v2173
    %v2324 = vadd.f32 %v2323, %v2177
    %v2325 = vadd.f32 %v2324, %v2181
    %v2326 = vadd.f32 %v2325, %v2185
    %v2327 = vadd.f32 %v2326, %v2189
    %v2328 = vadd.f32 %v2327, %v2193
    %v2329 = vadd.f32 %v2328, %v2197
    %v2330 = vrot.slane %v2329, 4
    %v2331 = vadd.f32 %v2329, %v2330
    %v2332 = vrot.slane %v2331, 2
    %v2333 = vadd.f32 %v2331, %v2332
    %v2334 = vrot.slane %v2333, 1
    %v2335 = vadd.f32 %v2333, %v2334
    %v2338 = vcombine.low %v2266, %v2335
    %v2340 = vunpack.c.l.s4 1966171168
    %v2341 = vunpack.c.0.s8 %v2340
    %v2342 = vlaneseq
    %v2343 = vshrl.u32 %v2342, 7
    %v2344 = vsub.s32 %v2341, %v2343
    %v2345 = vrot.slane %v2338, %v2344
    %v2347 = vunpack.c.l.s4 1966171168
    %v2348 = vunpack.c.0.s8 %v2347
    %v2349 = vlaneseq
    %v2350 = vshrl.u32 %v2349, 7
    %v2351 = vsub.s32 %v2348, %v2350
    %v2352 = vrot.slane %v2345, %v2351
    %v2354 = vadd.f32 %v1802, %v2352
    %2355 = vst.msk [vmem:[#allocation3] sm:$0x3] %vm1638, %v2354
    %2356 = vst.msk [vmem:[#allocation2] sm:$0x3] %vm1638, %v1797
    // Predicated region
    $region26: #{tpu_custom_call.1} parent=1 // pred_check
      %p2357 = pneg %p44
    $region27: #{tpu_custom_call.1} parent=1 // pred_check_branch
      %2359 = sbr.rel (%p2357) target = $region29
    $region28: #{tpu_custom_call.1} parent=1 // pred_region
      %vm2360 = vcmp.ne.s32.totalorder %v760, 4294967196
      %v2361 = vld [vmem:[#allocation2] sm:$0x3]
      %v2362 = vld [vmem:[#allocation3] sm:$0x3]
      %v2363 = vlog2.pop %v2362
      %v2364 = vmul.f32 %v2363, 0.6931472
      %v2365 = vadd.f32 %v2361, %v2364
      %v2366 = vld [vmem:[#allocation4] sm:$0x3]
      %v2367 = vsub.f32 %v2365, %v2366
      %v2368 = vsel %vm2360, %v2367, 0.0
      %2369 = vst.msk [vmem:[#allocation10] sm:$0x3] %vm1638, %v2368
    $region29: #{tpu_custom_call.1} parent=1 // pred_fallthru
      _
    // Predicated region
    $region30: #{tpu_custom_call.1} parent=1 // pred_check
      _
    $region31: #{tpu_custom_call.1} parent=1 // pred_check_branch
      %2371 = sbr.rel (0) target = $region33
    $region32: #{tpu_custom_call.1} parent=1 // pred_region
      %s2373 = ssub.s32 32, 32
      %2374 = vsyncadd [#allocation7], %s2373
      %s2376 = sshll.u32 [#allocation10], 4
      %s2377 = int_to_ptr.vmem [resolvable:$true] %s2376
      %2379 = dma.vmem_to_hbm [thread:$0]  %s2377, 32, %s3, [#allocation7]
    $region33: #{tpu_custom_call.1} parent=1 // pred_fallthru
      _
    // Predicated region
    $region34: #{tpu_custom_call.1} parent=1 // pred_check
      _
    $region35: #{tpu_custom_call.1} parent=1 // pred_check_branch
      %2381 = sbr.rel (0) target = $region37
    $region36: #{tpu_custom_call.1} parent=1 // pred_region
      %2382 = dma.done [#allocation7], 32
    $region37: #{tpu_custom_call.1} parent=1 // pred_fallthru
      _
    %2383 = vsyncpa [#allocation6], 1
    %2384 = vsyncpa [#allocation9], 1
    %2385 = vsyncpa [#allocation7], 1

</llo_original>
